<compile_context>
chip_gen: v6e
topology: v6e:2x2x1
jax: 0.10.0
libtpu: 0.0.40
codegen_flags: <defaults>
</compile_context>

<pallas_src>
import jax
import jax.numpy as jnp
from jax.experimental import pallas as pl
from jax.experimental.pallas import tpu as pltpu


def _bayes_lstm_fc_kernel(gx_ref, uall_ref, wfc_ref, bfc_ref, out_ref,
                          h_ref, c_ref):
    """One grid step == one chunk of T time steps.

    gx_ref  : (T, B, 4*Hp)  precomputed x@W_all + (b_w+b_u), gate-aligned layout
    uall_ref: (Hp, 4*Hp)    recurrent weights, gate-aligned layout
    wfc_ref : (1, Hp)       fc weight row (zero-padded past H)
    bfc_ref : (1, 1) SMEM   fc bias scalar
    out_ref : (B, T)        sigmoid(fc(h_t)) for the chunk (single slab store)
    h_ref/c_ref: (B, Hp)    VMEM scratch, persists across chunks
    """
    chunk = pl.program_id(0)

    @pl.when(chunk == 0)
    def _():
        h_ref[...] = jnp.zeros_like(h_ref)
        c_ref[...] = jnp.zeros_like(c_ref)

    T = gx_ref.shape[0]
    Hp = h_ref.shape[-1]

    u_all = uall_ref[...]         # (Hp, 4Hp), hoisted out of the time loop
    wfc = wfc_ref[...]            # (1, Hp)
    bfc = bfc_ref[0, 0]           # scalar from SMEM

    h = h_ref[...]                # (B, Hp)
    c = c_ref[...]                # (B, Hp)
    ys = []
    # T is a static Python int (small); fully unrolled -> static indexing,
    # aligned 128-lane gate slices, no per-step grid/DMA overhead.
    for t in range(T):
        gates = gx_ref[t] + jnp.dot(h, u_all,
                                    preferred_element_type=jnp.float32)  # (B, 4Hp)
        # gate order matches the reference module: [f, i, o, c_hat];
        # each gate sits in its own aligned 128-lane block.
        f_t = jax.nn.sigmoid(gates[:, 0 * Hp:1 * Hp])
        i_t = jax.nn.sigmoid(gates[:, 1 * Hp:2 * Hp])
        o_t = jax.nn.sigmoid(gates[:, 2 * Hp:3 * Hp])
        c_hat = jnp.tanh(gates[:, 3 * Hp:4 * Hp])

        c = f_t * c + i_t * c_hat
        h = o_t * jnp.tanh(c)

        # fc(H -> 1): VPU multiply + lane reduce (XLU), no 1-wide MXU matmul.
        ys.append(jnp.sum(h * wfc, axis=-1, keepdims=True) + bfc)   # (B, 1)

    h_ref[...] = h
    c_ref[...] = c
    # One slab store per chunk instead of T separate 1-lane stores.
    out_ref[...] = jax.nn.sigmoid(jnp.concatenate(ys, axis=-1)).astype(out_ref.dtype)


def combined_video_bayes_rnn(x, params, time_chunk=None):
    """x: (B, L, D) float32 -> (B, L, 1) float32 (batch-first, like the module)."""
    B, L, D = x.shape
    H = params["uall"].shape[0]
    Hp = max(128, ((H + 127) // 128) * 128)   # gate-aligned hidden padding

    # ---- pack weights: each of the 4 gates gets its own Hp-lane block --------
    def pad_gates(w, rows_pad):
        rows = w.shape[0]
        w4 = w.reshape(rows, 4, H)
        out = jnp.zeros((rows_pad, 4, Hp), w.dtype)
        out = out.at[:rows, :, :H].set(w4)
        return out.reshape(rows_pad, 4 * Hp)

    wall_p = pad_gates(params["wall"], D)                 # (D, 4Hp)
    uall_p = pad_gates(params["uall"], Hp)                # (Hp, 4Hp)  zero rows past H
    b_p = pad_gates(params["b"][None, :], 1)[0]           # (4Hp,)  folded b_w + b_u
    wfc_row = jnp.zeros((1, Hp), jnp.float32).at[0, :H].set(params["wfc"][:, 0])
    bfc = jnp.reshape(params["bfc"], (1, 1)).astype(jnp.float32)

    # ---- hoist the input projection out of the recurrence (one big GEMM) -----
    # time-major so the kernel indexes x_t with a free leading-axis view.
    gates_x = jnp.einsum("bld,dg->lbg", x, wall_p) + b_p  # (L, B, 4Hp)

    # Chunked time loop; T == L keeps grid overhead at a single invocation for
    # short clips.  For long sequences pick a T that divides L.
    T = L if time_chunk is None else time_chunk
    assert L % T == 0, "time_chunk must divide L"

    out = pl.pallas_call(
        _bayes_lstm_fc_kernel,
        out_shape=jax.ShapeDtypeStruct((B, L), jnp.float32),
        grid_spec=pltpu.PrefetchScalarGridSpec(
            num_scalar_prefetch=0,
            grid=(L // T,),
            in_specs=[
                pl.BlockSpec((T, B, 4 * Hp), lambda i: (i, 0, 0)),   # gates_x chunk
                pl.BlockSpec((Hp, 4 * Hp), lambda i: (0, 0)),        # U_all (resident)
                pl.BlockSpec((1, Hp), lambda i: (0, 0)),             # W_fc row
                pl.BlockSpec(memory_space=pltpu.MemorySpace.SMEM),   # b_fc scalar
            ],
            out_specs=pl.BlockSpec((B, T), lambda i: (0, i)),        # (B, T) slab
            scratch_shapes=[
                pltpu.VMEM((B, Hp), jnp.float32),   # h state (persists across chunks)
                pltpu.VMEM((B, Hp), jnp.float32),   # c state
            ],
        ),
        compiler_params=pltpu.CompilerParams(
            dimension_semantics=("arbitrary",)),    # time recurrence is sequential
    )(gates_x, uall_p, wfc_row, bfc)

    return out[..., None]   # (B, L, 1), matches torch.sigmoid(fc(lstm_out))


# ----------------------------- parameter build --------------------------------
def _sample_bayes_linear(key, in_f, out_f, prior_mu=0.0, prior_sigma=1.0):
    """Deterministic single sample of a BayesLinear: w = mu + exp(log_sig)*eps."""
    k_mu, k_eps, kb_mu, kb_eps = jax.random.split(key, 4)
    log_sigma = jnp.float32(-3.0)
    w_mu = prior_mu + 0.1 * prior_sigma * jax.random.normal(k_mu, (in_f, out_f), jnp.float32)
    w = w_mu + jnp.exp(log_sigma) * jax.random.normal(k_eps, (in_f, out_f), jnp.float32)
    b_mu = prior_mu + 0.1 * prior_sigma * jax.random.normal(kb_mu, (out_f,), jnp.float32)
    b = b_mu + jnp.exp(log_sigma) * jax.random.normal(kb_eps, (out_f,), jnp.float32)
    return w, b


def make_params(key, input_dim, hidden_dim, prior_mu=0.0, prior_sigma=1.0):
    keys = jax.random.split(key, 9)
    # gate order matches the reference module: [f, i, o, c_hat]
    w_list, u_list, b_list = [], [], []
    for g in range(4):
        w, bw = _sample_bayes_linear(keys[g], input_dim, hidden_dim, prior_mu, prior_sigma)
        u, bu = _sample_bayes_linear(keys[4 + g], hidden_dim, hidden_dim, prior_mu, prior_sigma)
        w_list.append(w)
        u_list.append(u)
        b_list.append(bw + bu)                       # fold the double bias here
    wfc, bfc = _sample_bayes_linear(keys[8], hidden_dim, 1, prior_mu, prior_sigma)
    return {
        "wall": jnp.concatenate(w_list, axis=1),     # (D, 4H)
        "uall": jnp.concatenate(u_list, axis=1),     # (H, 4H)
        "b": jnp.concatenate(b_list),                # (4H,)   = b_w + b_u
        "wfc": wfc,                                  # (H, 1)
        "bfc": bfc.reshape(1, 1),                    # (1, 1)
    }


# ------------------------------- reference -------------------------------------
def _reference(x, params):
    """Pure-JAX reference of the same forward (eval mode), unpadded weights."""
    B, L, D = x.shape
    H = params["uall"].shape[0]
    h = jnp.zeros((B, H), jnp.float32)
    c = jnp.zeros((B, H), jnp.float32)
    outs = []
    for t in range(L):
        gates = x[:, t] @ params["wall"] + h @ params["uall"] + params["b"]
        f = jax.nn.sigmoid(gates[:, 0 * H:1 * H])
        i = jax.nn.sigmoid(gates[:, 1 * H:2 * H])
        o = jax.nn.sigmoid(gates[:, 2 * H:3 * H])
        ch = jnp.tanh(gates[:, 3 * H:4 * H])
        c = f * c + i * ch
        h = o * jnp.tanh(c)
        outs.append(jax.nn.sigmoid(h @ params["wfc"] + params["bfc"]))
    return jnp.stack(outs, axis=1)   # (B, L, 1)


if __name__ == "__main__":
    # Small shapes implied by the module: batch=2, seq=8, input_dim=16, hidden=32.
    # (Real workloads should batch >=8 sequences to fill vreg sublanes / MXU rows.)
    B, L, D, H = 2, 8, 16, 32
    key = jax.random.PRNGKey(0)
    k_x, k_p = jax.random.split(key)
    x = jax.random.normal(k_x, (B, L, D), jnp.float32)
    params = make_params(k_p, D, H, prior_mu=0.0, prior_sigma=1.0)

    out = combined_video_bayes_rnn(x, params)
    out = jax.block_until_ready(out)

    ref = _reference(x, params)
    assert out.shape == (B, L, 1)
    assert jnp.allclose(out, ref, atol=5e-5, rtol=5e-5), "mismatch vs reference"
    print("KERNEL_OK")
</pallas_src>

<mosaic_0001>
module attributes {stable_mosaic.version = 11 : i64} {
  func.func @_bayes_lstm_fc_kernel(%arg0: i32, %arg1: memref<8x2x512xf32, #tpu.memory_space<vmem>>, %arg2: memref<128x512xf32, #tpu.memory_space<vmem>>, %arg3: memref<1x128xf32, #tpu.memory_space<vmem>>, %arg4: memref<1x1xf32, #tpu.memory_space<smem>>, %arg5: memref<2x8xf32, #tpu.memory_space<vmem>>, %arg6: memref<2x128xf32, #tpu.memory_space<vmem>>, %arg7: memref<2x128xf32, #tpu.memory_space<vmem>>) attributes {dimension_semantics = [#tpu.dimension_semantics<arbitrary>], iteration_bounds = array<i64: 1>, scalar_prefetch = 0 : i64, scratch_operands = 2 : i64, tpu.core_type = #tpu.core_type<tc>, window_params = [{transform_indices = @transform_0, window_bounds = array<i64: 8, 2, 512>}, {pipeline_mode = #tpu.pipeline_mode<synchronous>, transform_indices = @transform_1, window_bounds = array<i64: 128, 512>}, {pipeline_mode = #tpu.pipeline_mode<synchronous>, transform_indices = @transform_2, window_bounds = array<i64: 1, 128>}, {transform_indices = @transform_3, window_bounds = array<i64: 1, 1>}, {transform_indices = @transform_4, window_bounds = array<i64: 2, 8>}]} {
    %c0_i32 = arith.constant 0 : i32
    %0 = arith.cmpi eq, %arg0, %c0_i32 : i32
    %1 = arith.extui %0 : i1 to i32
    %c0_i32_0 = arith.constant 0 : i32
    %2 = arith.cmpi ne, %1, %c0_i32_0 : i32
    scf.if %2 {
      %cst_73 = arith.constant 0.000000e+00 : f32
      %297 = vector.broadcast %cst_73 : f32 to vector<2x128xf32>
      %c0_74 = arith.constant 0 : index
      %c0_75 = arith.constant 0 : index
      %298 = vector.load %arg6[%c0_74, %c0_75] : memref<2x128xf32, #tpu.memory_space<vmem>>, vector<2x128xf32>
      tpu.vector_store %arg6[%c0_74, %c0_75], %297 {strides = array<i32>} : memref<2x128xf32, #tpu.memory_space<vmem>>, vector<2x128xf32>,
      %cst_76 = arith.constant 0.000000e+00 : f32
      %299 = vector.broadcast %cst_76 : f32 to vector<2x128xf32>
      %c0_77 = arith.constant 0 : index
      %c0_78 = arith.constant 0 : index
      %300 = vector.load %arg7[%c0_77, %c0_78] : memref<2x128xf32, #tpu.memory_space<vmem>>, vector<2x128xf32>
      tpu.vector_store %arg7[%c0_77, %c0_78], %299 {strides = array<i32>} : memref<2x128xf32, #tpu.memory_space<vmem>>, vector<2x128xf32>,
    } else {
    }
    %c0 = arith.constant 0 : index
    %c0_1 = arith.constant 0 : index
    %3 = vector.load %arg2[%c0, %c0_1] : memref<128x512xf32, #tpu.memory_space<vmem>>, vector<128x512xf32>
    %c0_2 = arith.constant 0 : index
    %c0_3 = arith.constant 0 : index
    %4 = vector.load %arg3[%c0_2, %c0_3] : memref<1x128xf32, #tpu.memory_space<vmem>>, vector<1x128xf32>
    %c0_4 = arith.constant 0 : index
    %c0_5 = arith.constant 0 : index
    %5 = memref.load %arg4[%c0_4, %c0_5] : memref<1x1xf32, #tpu.memory_space<smem>>
    %c0_6 = arith.constant 0 : index
    %c0_7 = arith.constant 0 : index
    %6 = vector.load %arg6[%c0_6, %c0_7] : memref<2x128xf32, #tpu.memory_space<vmem>>, vector<2x128xf32>
    %c0_8 = arith.constant 0 : index
    %c0_9 = arith.constant 0 : index
    %7 = vector.load %arg7[%c0_8, %c0_9] : memref<2x128xf32, #tpu.memory_space<vmem>>, vector<2x128xf32>
    %c0_10 = arith.constant 0 : index
    %c0_11 = arith.constant 0 : index
    %c0_12 = arith.constant 0 : index
    %8 = vector.load %arg1[%c0_10, %c0_11, %c0_12] : memref<8x2x512xf32, #tpu.memory_space<vmem>>, vector<1x2x512xf32>
    %9 = vector.shape_cast %8 : vector<1x2x512xf32> to vector<2x512xf32>
    %cst = arith.constant dense<0.000000e+00> : vector<2x512xf32>
    %10 = tpu.matmul %6, %3, %cst {dimension_numbers = #tpu.dot_dimension_numbers<[1], [0], [0], [1], [0, 0, 1, 1], [], []>} : vector<2x128xf32>, vector<128x512xf32>, vector<2x512xf32> -> vector<2x512xf32>
    %11 = arith.addf %9, %10 : vector<2x512xf32>
    %12 = vector.extract_strided_slice %11 {offsets = [0, 0], sizes = [2, 128], strides = [1, 1]} : vector<2x512xf32> to vector<2x128xf32>
    %13 = arith.negf %12 : vector<2x128xf32>
    %14 = math.exp %13 : vector<2x128xf32>
    %cst_13 = arith.constant 1.000000e+00 : f32
    %15 = vector.broadcast %cst_13 : f32 to vector<2x128xf32>
    %16 = arith.addf %15, %14 : vector<2x128xf32>
    %17 = arith.divf %15, %16 : vector<2x128xf32>
    %18 = vector.extract_strided_slice %11 {offsets = [0, 128], sizes = [2, 128], strides = [1, 1]} : vector<2x512xf32> to vector<2x128xf32>
    %19 = arith.negf %18 : vector<2x128xf32>
    %20 = math.exp %19 : vector<2x128xf32>
    %cst_14 = arith.constant 1.000000e+00 : f32
    %21 = vector.broadcast %cst_14 : f32 to vector<2x128xf32>
    %22 = arith.addf %21, %20 : vector<2x128xf32>
    %23 = arith.divf %21, %22 : vector<2x128xf32>
    %24 = vector.extract_strided_slice %11 {offsets = [0, 256], sizes = [2, 128], strides = [1, 1]} : vector<2x512xf32> to vector<2x128xf32>
    %25 = arith.negf %24 : vector<2x128xf32>
    %26 = math.exp %25 : vector<2x128xf32>
    %cst_15 = arith.constant 1.000000e+00 : f32
    %27 = vector.broadcast %cst_15 : f32 to vector<2x128xf32>
    %28 = arith.addf %27, %26 : vector<2x128xf32>
    %29 = arith.divf %27, %28 : vector<2x128xf32>
    %30 = vector.extract_strided_slice %11 {offsets = [0, 384], sizes = [2, 128], strides = [1, 1]} : vector<2x512xf32> to vector<2x128xf32>
    %31 = math.tanh %30 : vector<2x128xf32>
    %32 = arith.mulf %17, %7 : vector<2x128xf32>
    %33 = arith.mulf %23, %31 : vector<2x128xf32>
    %34 = arith.addf %32, %33 : vector<2x128xf32>
    %35 = math.tanh %34 : vector<2x128xf32>
    %36 = arith.mulf %29, %35 : vector<2x128xf32>
    %37 = vector.broadcast %4 : vector<1x128xf32> to vector<2x128xf32>
    %38 = arith.mulf %36, %37 : vector<2x128xf32>
    %cst_16 = arith.constant dense<0.000000e+00> : vector<2xf32>
    %39 = vector.multi_reduction <add>, %38, %cst_16 [1] : vector<2x128xf32> to vector<2xf32>
    %40 = vector.shape_cast %39 : vector<2xf32> to vector<2x1xf32>
    %41 = vector.broadcast %5 : f32 to vector<2x1xf32>
    %42 = arith.addf %40, %41 : vector<2x1xf32>
    %c1 = arith.constant 1 : index
    %c0_17 = arith.constant 0 : index
    %c0_18 = arith.constant 0 : index
    %43 = vector.load %arg1[%c1, %c0_17, %c0_18] : memref<8x2x512xf32, #tpu.memory_space<vmem>>, vector<1x2x512xf32>
    %44 = vector.shape_cast %43 : vector<1x2x512xf32> to vector<2x512xf32>
    %cst_19 = arith.constant dense<0.000000e+00> : vector<2x512xf32>
    %45 = tpu.matmul %36, %3, %cst_19 {dimension_numbers = #tpu.dot_dimension_numbers<[1], [0], [0], [1], [0, 0, 1, 1], [], []>} : vector<2x128xf32>, vector<128x512xf32>, vector<2x512xf32> -> vector<2x512xf32>
    %46 = arith.addf %44, %45 : vector<2x512xf32>
    %47 = vector.extract_strided_slice %46 {offsets = [0, 0], sizes = [2, 128], strides = [1, 1]} : vector<2x512xf32> to vector<2x128xf32>
    %48 = arith.negf %47 : vector<2x128xf32>
    %49 = math.exp %48 : vector<2x128xf32>
    %cst_20 = arith.constant 1.000000e+00 : f32
    %50 = vector.broadcast %cst_20 : f32 to vector<2x128xf32>
    %51 = arith.addf %50, %49 : vector<2x128xf32>
    %52 = arith.divf %50, %51 : vector<2x128xf32>
    %53 = vector.extract_strided_slice %46 {offsets = [0, 128], sizes = [2, 128], strides = [1, 1]} : vector<2x512xf32> to vector<2x128xf32>
    %54 = arith.negf %53 : vector<2x128xf32>
    %55 = math.exp %54 : vector<2x128xf32>
    %cst_21 = arith.constant 1.000000e+00 : f32
    %56 = vector.broadcast %cst_21 : f32 to vector<2x128xf32>
    %57 = arith.addf %56, %55 : vector<2x128xf32>
    %58 = arith.divf %56, %57 : vector<2x128xf32>
    %59 = vector.extract_strided_slice %46 {offsets = [0, 256], sizes = [2, 128], strides = [1, 1]} : vector<2x512xf32> to vector<2x128xf32>
    %60 = arith.negf %59 : vector<2x128xf32>
    %61 = math.exp %60 : vector<2x128xf32>
    %cst_22 = arith.constant 1.000000e+00 : f32
    %62 = vector.broadcast %cst_22 : f32 to vector<2x128xf32>
    %63 = arith.addf %62, %61 : vector<2x128xf32>
    %64 = arith.divf %62, %63 : vector<2x128xf32>
    %65 = vector.extract_strided_slice %46 {offsets = [0, 384], sizes = [2, 128], strides = [1, 1]} : vector<2x512xf32> to vector<2x128xf32>
    %66 = math.tanh %65 : vector<2x128xf32>
    %67 = arith.mulf %52, %34 : vector<2x128xf32>
    %68 = arith.mulf %58, %66 : vector<2x128xf32>
    %69 = arith.addf %67, %68 : vector<2x128xf32>
    %70 = math.tanh %69 : vector<2x128xf32>
    %71 = arith.mulf %64, %70 : vector<2x128xf32>
    %72 = vector.broadcast %4 : vector<1x128xf32> to vector<2x128xf32>
    %73 = arith.mulf %71, %72 : vector<2x128xf32>
    %cst_23 = arith.constant dense<0.000000e+00> : vector<2xf32>
    %74 = vector.multi_reduction <add>, %73, %cst_23 [1] : vector<2x128xf32> to vector<2xf32>
    %75 = vector.shape_cast %74 : vector<2xf32> to vector<2x1xf32>
    %76 = vector.broadcast %5 : f32 to vector<2x1xf32>
    %77 = arith.addf %75, %76 : vector<2x1xf32>
    %c2 = arith.constant 2 : index
    %c0_24 = arith.constant 0 : index
    %c0_25 = arith.constant 0 : index
    %78 = vector.load %arg1[%c2, %c0_24, %c0_25] : memref<8x2x512xf32, #tpu.memory_space<vmem>>, vector<1x2x512xf32>
    %79 = vector.shape_cast %78 : vector<1x2x512xf32> to vector<2x512xf32>
    %cst_26 = arith.constant dense<0.000000e+00> : vector<2x512xf32>
    %80 = tpu.matmul %71, %3, %cst_26 {dimension_numbers = #tpu.dot_dimension_numbers<[1], [0], [0], [1], [0, 0, 1, 1], [], []>} : vector<2x128xf32>, vector<128x512xf32>, vector<2x512xf32> -> vector<2x512xf32>
    %81 = arith.addf %79, %80 : vector<2x512xf32>
    %82 = vector.extract_strided_slice %81 {offsets = [0, 0], sizes = [2, 128], strides = [1, 1]} : vector<2x512xf32> to vector<2x128xf32>
    %83 = arith.negf %82 : vector<2x128xf32>
    %84 = math.exp %83 : vector<2x128xf32>
    %cst_27 = arith.constant 1.000000e+00 : f32
    %85 = vector.broadcast %cst_27 : f32 to vector<2x128xf32>
    %86 = arith.addf %85, %84 : vector<2x128xf32>
    %87 = arith.divf %85, %86 : vector<2x128xf32>
    %88 = vector.extract_strided_slice %81 {offsets = [0, 128], sizes = [2, 128], strides = [1, 1]} : vector<2x512xf32> to vector<2x128xf32>
    %89 = arith.negf %88 : vector<2x128xf32>
    %90 = math.exp %89 : vector<2x128xf32>
    %cst_28 = arith.constant 1.000000e+00 : f32
    %91 = vector.broadcast %cst_28 : f32 to vector<2x128xf32>
    %92 = arith.addf %91, %90 : vector<2x128xf32>
    %93 = arith.divf %91, %92 : vector<2x128xf32>
    %94 = vector.extract_strided_slice %81 {offsets = [0, 256], sizes = [2, 128], strides = [1, 1]} : vector<2x512xf32> to vector<2x128xf32>
    %95 = arith.negf %94 : vector<2x128xf32>
    %96 = math.exp %95 : vector<2x128xf32>
    %cst_29 = arith.constant 1.000000e+00 : f32
    %97 = vector.broadcast %cst_29 : f32 to vector<2x128xf32>
    %98 = arith.addf %97, %96 : vector<2x128xf32>
    %99 = arith.divf %97, %98 : vector<2x128xf32>
    %100 = vector.extract_strided_slice %81 {offsets = [0, 384], sizes = [2, 128], strides = [1, 1]} : vector<2x512xf32> to vector<2x128xf32>
    %101 = math.tanh %100 : vector<2x128xf32>
    %102 = arith.mulf %87, %69 : vector<2x128xf32>
    %103 = arith.mulf %93, %101 : vector<2x128xf32>
    %104 = arith.addf %102, %103 : vector<2x128xf32>
    %105 = math.tanh %104 : vector<2x128xf32>
    %106 = arith.mulf %99, %105 : vector<2x128xf32>
    %107 = vector.broadcast %4 : vector<1x128xf32> to vector<2x128xf32>
    %108 = arith.mulf %106, %107 : vector<2x128xf32>
    %cst_30 = arith.constant dense<0.000000e+00> : vector<2xf32>
    %109 = vector.multi_reduction <add>, %108, %cst_30 [1] : vector<2x128xf32> to vector<2xf32>
    %110 = vector.shape_cast %109 : vector<2xf32> to vector<2x1xf32>
    %111 = vector.broadcast %5 : f32 to vector<2x1xf32>
    %112 = arith.addf %110, %111 : vector<2x1xf32>
    %c3 = arith.constant 3 : index
    %c0_31 = arith.constant 0 : index
    %c0_32 = arith.constant 0 : index
    %113 = vector.load %arg1[%c3, %c0_31, %c0_32] : memref<8x2x512xf32, #tpu.memory_space<vmem>>, vector<1x2x512xf32>
    %114 = vector.shape_cast %113 : vector<1x2x512xf32> to vector<2x512xf32>
    %cst_33 = arith.constant dense<0.000000e+00> : vector<2x512xf32>
    %115 = tpu.matmul %106, %3, %cst_33 {dimension_numbers = #tpu.dot_dimension_numbers<[1], [0], [0], [1], [0, 0, 1, 1], [], []>} : vector<2x128xf32>, vector<128x512xf32>, vector<2x512xf32> -> vector<2x512xf32>
    %116 = arith.addf %114, %115 : vector<2x512xf32>
    %117 = vector.extract_strided_slice %116 {offsets = [0, 0], sizes = [2, 128], strides = [1, 1]} : vector<2x512xf32> to vector<2x128xf32>
    %118 = arith.negf %117 : vector<2x128xf32>
    %119 = math.exp %118 : vector<2x128xf32>
    %cst_34 = arith.constant 1.000000e+00 : f32
    %120 = vector.broadcast %cst_34 : f32 to vector<2x128xf32>
    %121 = arith.addf %120, %119 : vector<2x128xf32>
    %122 = arith.divf %120, %121 : vector<2x128xf32>
    %123 = vector.extract_strided_slice %116 {offsets = [0, 128], sizes = [2, 128], strides = [1, 1]} : vector<2x512xf32> to vector<2x128xf32>
    %124 = arith.negf %123 : vector<2x128xf32>
    %125 = math.exp %124 : vector<2x128xf32>
    %cst_35 = arith.constant 1.000000e+00 : f32
    %126 = vector.broadcast %cst_35 : f32 to vector<2x128xf32>
    %127 = arith.addf %126, %125 : vector<2x128xf32>
    %128 = arith.divf %126, %127 : vector<2x128xf32>
    %129 = vector.extract_strided_slice %116 {offsets = [0, 256], sizes = [2, 128], strides = [1, 1]} : vector<2x512xf32> to vector<2x128xf32>
    %130 = arith.negf %129 : vector<2x128xf32>
    %131 = math.exp %130 : vector<2x128xf32>
    %cst_36 = arith.constant 1.000000e+00 : f32
    %132 = vector.broadcast %cst_36 : f32 to vector<2x128xf32>
    %133 = arith.addf %132, %131 : vector<2x128xf32>
    %134 = arith.divf %132, %133 : vector<2x128xf32>
    %135 = vector.extract_strided_slice %116 {offsets = [0, 384], sizes = [2, 128], strides = [1, 1]} : vector<2x512xf32> to vector<2x128xf32>
    %136 = math.tanh %135 : vector<2x128xf32>
    %137 = arith.mulf %122, %104 : vector<2x128xf32>
    %138 = arith.mulf %128, %136 : vector<2x128xf32>
    %139 = arith.addf %137, %138 : vector<2x128xf32>
    %140 = math.tanh %139 : vector<2x128xf32>
    %141 = arith.mulf %134, %140 : vector<2x128xf32>
    %142 = vector.broadcast %4 : vector<1x128xf32> to vector<2x128xf32>
    %143 = arith.mulf %141, %142 : vector<2x128xf32>
    %cst_37 = arith.constant dense<0.000000e+00> : vector<2xf32>
    %144 = vector.multi_reduction <add>, %143, %cst_37 [1] : vector<2x128xf32> to vector<2xf32>
    %145 = vector.shape_cast %144 : vector<2xf32> to vector<2x1xf32>
    %146 = vector.broadcast %5 : f32 to vector<2x1xf32>
    %147 = arith.addf %145, %146 : vector<2x1xf32>
    %c4 = arith.constant 4 : index
    %c0_38 = arith.constant 0 : index
    %c0_39 = arith.constant 0 : index
    %148 = vector.load %arg1[%c4, %c0_38, %c0_39] : memref<8x2x512xf32, #tpu.memory_space<vmem>>, vector<1x2x512xf32>
    %149 = vector.shape_cast %148 : vector<1x2x512xf32> to vector<2x512xf32>
    %cst_40 = arith.constant dense<0.000000e+00> : vector<2x512xf32>
    %150 = tpu.matmul %141, %3, %cst_40 {dimension_numbers = #tpu.dot_dimension_numbers<[1], [0], [0], [1], [0, 0, 1, 1], [], []>} : vector<2x128xf32>, vector<128x512xf32>, vector<2x512xf32> -> vector<2x512xf32>
    %151 = arith.addf %149, %150 : vector<2x512xf32>
    %152 = vector.extract_strided_slice %151 {offsets = [0, 0], sizes = [2, 128], strides = [1, 1]} : vector<2x512xf32> to vector<2x128xf32>
    %153 = arith.negf %152 : vector<2x128xf32>
    %154 = math.exp %153 : vector<2x128xf32>
    %cst_41 = arith.constant 1.000000e+00 : f32
    %155 = vector.broadcast %cst_41 : f32 to vector<2x128xf32>
    %156 = arith.addf %155, %154 : vector<2x128xf32>
    %157 = arith.divf %155, %156 : vector<2x128xf32>
    %158 = vector.extract_strided_slice %151 {offsets = [0, 128], sizes = [2, 128], strides = [1, 1]} : vector<2x512xf32> to vector<2x128xf32>
    %159 = arith.negf %158 : vector<2x128xf32>
    %160 = math.exp %159 : vector<2x128xf32>
    %cst_42 = arith.constant 1.000000e+00 : f32
    %161 = vector.broadcast %cst_42 : f32 to vector<2x128xf32>
    %162 = arith.addf %161, %160 : vector<2x128xf32>
    %163 = arith.divf %161, %162 : vector<2x128xf32>
    %164 = vector.extract_strided_slice %151 {offsets = [0, 256], sizes = [2, 128], strides = [1, 1]} : vector<2x512xf32> to vector<2x128xf32>
    %165 = arith.negf %164 : vector<2x128xf32>
    %166 = math.exp %165 : vector<2x128xf32>
    %cst_43 = arith.constant 1.000000e+00 : f32
    %167 = vector.broadcast %cst_43 : f32 to vector<2x128xf32>
    %168 = arith.addf %167, %166 : vector<2x128xf32>
    %169 = arith.divf %167, %168 : vector<2x128xf32>
    %170 = vector.extract_strided_slice %151 {offsets = [0, 384], sizes = [2, 128], strides = [1, 1]} : vector<2x512xf32> to vector<2x128xf32>
    %171 = math.tanh %170 : vector<2x128xf32>
    %172 = arith.mulf %157, %139 : vector<2x128xf32>
    %173 = arith.mulf %163, %171 : vector<2x128xf32>
    %174 = arith.addf %172, %173 : vector<2x128xf32>
    %175 = math.tanh %174 : vector<2x128xf32>
    %176 = arith.mulf %169, %175 : vector<2x128xf32>
    %177 = vector.broadcast %4 : vector<1x128xf32> to vector<2x128xf32>
    %178 = arith.mulf %176, %177 : vector<2x128xf32>
    %cst_44 = arith.constant dense<0.000000e+00> : vector<2xf32>
    %179 = vector.multi_reduction <add>, %178, %cst_44 [1] : vector<2x128xf32> to vector<2xf32>
    %180 = vector.shape_cast %179 : vector<2xf32> to vector<2x1xf32>
    %181 = vector.broadcast %5 : f32 to vector<2x1xf32>
    %182 = arith.addf %180, %181 : vector<2x1xf32>
    %c5 = arith.constant 5 : index
    %c0_45 = arith.constant 0 : index
    %c0_46 = arith.constant 0 : index
    %183 = vector.load %arg1[%c5, %c0_45, %c0_46] : memref<8x2x512xf32, #tpu.memory_space<vmem>>, vector<1x2x512xf32>
    %184 = vector.shape_cast %183 : vector<1x2x512xf32> to vector<2x512xf32>
    %cst_47 = arith.constant dense<0.000000e+00> : vector<2x512xf32>
    %185 = tpu.matmul %176, %3, %cst_47 {dimension_numbers = #tpu.dot_dimension_numbers<[1], [0], [0], [1], [0, 0, 1, 1], [], []>} : vector<2x128xf32>, vector<128x512xf32>, vector<2x512xf32> -> vector<2x512xf32>
    %186 = arith.addf %184, %185 : vector<2x512xf32>
    %187 = vector.extract_strided_slice %186 {offsets = [0, 0], sizes = [2, 128], strides = [1, 1]} : vector<2x512xf32> to vector<2x128xf32>
    %188 = arith.negf %187 : vector<2x128xf32>
    %189 = math.exp %188 : vector<2x128xf32>
    %cst_48 = arith.constant 1.000000e+00 : f32
    %190 = vector.broadcast %cst_48 : f32 to vector<2x128xf32>
    %191 = arith.addf %190, %189 : vector<2x128xf32>
    %192 = arith.divf %190, %191 : vector<2x128xf32>
    %193 = vector.extract_strided_slice %186 {offsets = [0, 128], sizes = [2, 128], strides = [1, 1]} : vector<2x512xf32> to vector<2x128xf32>
    %194 = arith.negf %193 : vector<2x128xf32>
    %195 = math.exp %194 : vector<2x128xf32>
    %cst_49 = arith.constant 1.000000e+00 : f32
    %196 = vector.broadcast %cst_49 : f32 to vector<2x128xf32>
    %197 = arith.addf %196, %195 : vector<2x128xf32>
    %198 = arith.divf %196, %197 : vector<2x128xf32>
    %199 = vector.extract_strided_slice %186 {offsets = [0, 256], sizes = [2, 128], strides = [1, 1]} : vector<2x512xf32> to vector<2x128xf32>
    %200 = arith.negf %199 : vector<2x128xf32>
    %201 = math.exp %200 : vector<2x128xf32>
    %cst_50 = arith.constant 1.000000e+00 : f32
    %202 = vector.broadcast %cst_50 : f32 to vector<2x128xf32>
    %203 = arith.addf %202, %201 : vector<2x128xf32>
    %204 = arith.divf %202, %203 : vector<2x128xf32>
    %205 = vector.extract_strided_slice %186 {offsets = [0, 384], sizes = [2, 128], strides = [1, 1]} : vector<2x512xf32> to vector<2x128xf32>
    %206 = math.tanh %205 : vector<2x128xf32>
    %207 = arith.mulf %192, %174 : vector<2x128xf32>
    %208 = arith.mulf %198, %206 : vector<2x128xf32>
    %209 = arith.addf %207, %208 : vector<2x128xf32>
    %210 = math.tanh %209 : vector<2x128xf32>
    %211 = arith.mulf %204, %210 : vector<2x128xf32>
    %212 = vector.broadcast %4 : vector<1x128xf32> to vector<2x128xf32>
    %213 = arith.mulf %211, %212 : vector<2x128xf32>
    %cst_51 = arith.constant dense<0.000000e+00> : vector<2xf32>
    %214 = vector.multi_reduction <add>, %213, %cst_51 [1] : vector<2x128xf32> to vector<2xf32>
    %215 = vector.shape_cast %214 : vector<2xf32> to vector<2x1xf32>
    %216 = vector.broadcast %5 : f32 to vector<2x1xf32>
    %217 = arith.addf %215, %216 : vector<2x1xf32>
    %c6 = arith.constant 6 : index
    %c0_52 = arith.constant 0 : index
    %c0_53 = arith.constant 0 : index
    %218 = vector.load %arg1[%c6, %c0_52, %c0_53] : memref<8x2x512xf32, #tpu.memory_space<vmem>>, vector<1x2x512xf32>
    %219 = vector.shape_cast %218 : vector<1x2x512xf32> to vector<2x512xf32>
    %cst_54 = arith.constant dense<0.000000e+00> : vector<2x512xf32>
    %220 = tpu.matmul %211, %3, %cst_54 {dimension_numbers = #tpu.dot_dimension_numbers<[1], [0], [0], [1], [0, 0, 1, 1], [], []>} : vector<2x128xf32>, vector<128x512xf32>, vector<2x512xf32> -> vector<2x512xf32>
    %221 = arith.addf %219, %220 : vector<2x512xf32>
    %222 = vector.extract_strided_slice %221 {offsets = [0, 0], sizes = [2, 128], strides = [1, 1]} : vector<2x512xf32> to vector<2x128xf32>
    %223 = arith.negf %222 : vector<2x128xf32>
    %224 = math.exp %223 : vector<2x128xf32>
    %cst_55 = arith.constant 1.000000e+00 : f32
    %225 = vector.broadcast %cst_55 : f32 to vector<2x128xf32>
    %226 = arith.addf %225, %224 : vector<2x128xf32>
    %227 = arith.divf %225, %226 : vector<2x128xf32>
    %228 = vector.extract_strided_slice %221 {offsets = [0, 128], sizes = [2, 128], strides = [1, 1]} : vector<2x512xf32> to vector<2x128xf32>
    %229 = arith.negf %228 : vector<2x128xf32>
    %230 = math.exp %229 : vector<2x128xf32>
    %cst_56 = arith.constant 1.000000e+00 : f32
    %231 = vector.broadcast %cst_56 : f32 to vector<2x128xf32>
    %232 = arith.addf %231, %230 : vector<2x128xf32>
    %233 = arith.divf %231, %232 : vector<2x128xf32>
    %234 = vector.extract_strided_slice %221 {offsets = [0, 256], sizes = [2, 128], strides = [1, 1]} : vector<2x512xf32> to vector<2x128xf32>
    %235 = arith.negf %234 : vector<2x128xf32>
    %236 = math.exp %235 : vector<2x128xf32>
    %cst_57 = arith.constant 1.000000e+00 : f32
    %237 = vector.broadcast %cst_57 : f32 to vector<2x128xf32>
    %238 = arith.addf %237, %236 : vector<2x128xf32>
    %239 = arith.divf %237, %238 : vector<2x128xf32>
    %240 = vector.extract_strided_slice %221 {offsets = [0, 384], sizes = [2, 128], strides = [1, 1]} : vector<2x512xf32> to vector<2x128xf32>
    %241 = math.tanh %240 : vector<2x128xf32>
    %242 = arith.mulf %227, %209 : vector<2x128xf32>
    %243 = arith.mulf %233, %241 : vector<2x128xf32>
    %244 = arith.addf %242, %243 : vector<2x128xf32>
    %245 = math.tanh %244 : vector<2x128xf32>
    %246 = arith.mulf %239, %245 : vector<2x128xf32>
    %247 = vector.broadcast %4 : vector<1x128xf32> to vector<2x128xf32>
    %248 = arith.mulf %246, %247 : vector<2x128xf32>
    %cst_58 = arith.constant dense<0.000000e+00> : vector<2xf32>
    %249 = vector.multi_reduction <add>, %248, %cst_58 [1] : vector<2x128xf32> to vector<2xf32>
    %250 = vector.shape_cast %249 : vector<2xf32> to vector<2x1xf32>
    %251 = vector.broadcast %5 : f32 to vector<2x1xf32>
    %252 = arith.addf %250, %251 : vector<2x1xf32>
    %c7 = arith.constant 7 : index
    %c0_59 = arith.constant 0 : index
    %c0_60 = arith.constant 0 : index
    %253 = vector.load %arg1[%c7, %c0_59, %c0_60] : memref<8x2x512xf32, #tpu.memory_space<vmem>>, vector<1x2x512xf32>
    %254 = vector.shape_cast %253 : vector<1x2x512xf32> to vector<2x512xf32>
    %cst_61 = arith.constant dense<0.000000e+00> : vector<2x512xf32>
    %255 = tpu.matmul %246, %3, %cst_61 {dimension_numbers = #tpu.dot_dimension_numbers<[1], [0], [0], [1], [0, 0, 1, 1], [], []>} : vector<2x128xf32>, vector<128x512xf32>, vector<2x512xf32> -> vector<2x512xf32>
    %256 = arith.addf %254, %255 : vector<2x512xf32>
    %257 = vector.extract_strided_slice %256 {offsets = [0, 0], sizes = [2, 128], strides = [1, 1]} : vector<2x512xf32> to vector<2x128xf32>
    %258 = arith.negf %257 : vector<2x128xf32>
    %259 = math.exp %258 : vector<2x128xf32>
    %cst_62 = arith.constant 1.000000e+00 : f32
    %260 = vector.broadcast %cst_62 : f32 to vector<2x128xf32>
    %261 = arith.addf %260, %259 : vector<2x128xf32>
    %262 = arith.divf %260, %261 : vector<2x128xf32>
    %263 = vector.extract_strided_slice %256 {offsets = [0, 128], sizes = [2, 128], strides = [1, 1]} : vector<2x512xf32> to vector<2x128xf32>
    %264 = arith.negf %263 : vector<2x128xf32>
    %265 = math.exp %264 : vector<2x128xf32>
    %cst_63 = arith.constant 1.000000e+00 : f32
    %266 = vector.broadcast %cst_63 : f32 to vector<2x128xf32>
    %267 = arith.addf %266, %265 : vector<2x128xf32>
    %268 = arith.divf %266, %267 : vector<2x128xf32>
    %269 = vector.extract_strided_slice %256 {offsets = [0, 256], sizes = [2, 128], strides = [1, 1]} : vector<2x512xf32> to vector<2x128xf32>
    %270 = arith.negf %269 : vector<2x128xf32>
    %271 = math.exp %270 : vector<2x128xf32>
    %cst_64 = arith.constant 1.000000e+00 : f32
    %272 = vector.broadcast %cst_64 : f32 to vector<2x128xf32>
    %273 = arith.addf %272, %271 : vector<2x128xf32>
    %274 = arith.divf %272, %273 : vector<2x128xf32>
    %275 = vector.extract_strided_slice %256 {offsets = [0, 384], sizes = [2, 128], strides = [1, 1]} : vector<2x512xf32> to vector<2x128xf32>
    %276 = math.tanh %275 : vector<2x128xf32>
    %277 = arith.mulf %262, %244 : vector<2x128xf32>
    %278 = arith.mulf %268, %276 : vector<2x128xf32>
    %279 = arith.addf %277, %278 : vector<2x128xf32>
    %280 = math.tanh %279 : vector<2x128xf32>
    %281 = arith.mulf %274, %280 : vector<2x128xf32>
    %282 = vector.broadcast %4 : vector<1x128xf32> to vector<2x128xf32>
    %283 = arith.mulf %281, %282 : vector<2x128xf32>
    %cst_65 = arith.constant dense<0.000000e+00> : vector<2xf32>
    %284 = vector.multi_reduction <add>, %283, %cst_65 [1] : vector<2x128xf32> to vector<2xf32>
    %285 = vector.shape_cast %284 : vector<2xf32> to vector<2x1xf32>
    %286 = vector.broadcast %5 : f32 to vector<2x1xf32>
    %287 = arith.addf %285, %286 : vector<2x1xf32>
    %c0_66 = arith.constant 0 : index
    %c0_67 = arith.constant 0 : index
    %288 = vector.load %arg6[%c0_66, %c0_67] : memref<2x128xf32, #tpu.memory_space<vmem>>, vector<2x128xf32>
    tpu.vector_store %arg6[%c0_66, %c0_67], %281 {strides = array<i32>} : memref<2x128xf32, #tpu.memory_space<vmem>>, vector<2x128xf32>,
    %c0_68 = arith.constant 0 : index
    %c0_69 = arith.constant 0 : index
    %289 = vector.load %arg7[%c0_68, %c0_69] : memref<2x128xf32, #tpu.memory_space<vmem>>, vector<2x128xf32>
    tpu.vector_store %arg7[%c0_68, %c0_69], %279 {strides = array<i32>} : memref<2x128xf32, #tpu.memory_space<vmem>>, vector<2x128xf32>,
    %290 = tpu.concatenate %42, %77, %112, %147, %182, %217, %252, %287 in 1 : vector<2x1xf32>, vector<2x1xf32>, vector<2x1xf32>, vector<2x1xf32>, vector<2x1xf32>, vector<2x1xf32>, vector<2x1xf32>, vector<2x1xf32> -> vector<2x8xf32>
    %291 = arith.negf %290 : vector<2x8xf32>
    %292 = math.exp %291 : vector<2x8xf32>
    %cst_70 = arith.constant 1.000000e+00 : f32
    %293 = vector.broadcast %cst_70 : f32 to vector<2x8xf32>
    %294 = arith.addf %293, %292 : vector<2x8xf32>
    %295 = arith.divf %293, %294 : vector<2x8xf32>
    %c0_71 = arith.constant 0 : index
    %c0_72 = arith.constant 0 : index
    %296 = vector.load %arg5[%c0_71, %c0_72] : memref<2x8xf32, #tpu.memory_space<vmem>>, vector<2x8xf32>
    tpu.vector_store %arg5[%c0_71, %c0_72], %295 {strides = array<i32>} : memref<2x8xf32, #tpu.memory_space<vmem>>, vector<2x8xf32>,
    return
  }
  func.func @transform_0(%arg0: i32) -> (i32, i32, i32) {
    %c0_i32 = arith.constant 0 : i32
    %c0_i32_0 = arith.constant 0 : i32
    %c0_i32_1 = arith.constant 0 : i32
    return %arg0, %c0_i32, %c0_i32_0 : i32, i32, i32
  }
  func.func @transform_1(%arg0: i32) -> (i32, i32) {
    %c0_i32 = arith.constant 0 : i32
    %c0_i32_0 = arith.constant 0 : i32
    %c0_i32_1 = arith.constant 0 : i32
    return %c0_i32, %c0_i32_0 : i32, i32
  }
  func.func @transform_2(%arg0: i32) -> (i32, i32) {
    %c0_i32 = arith.constant 0 : i32
    %c0_i32_0 = arith.constant 0 : i32
    %c0_i32_1 = arith.constant 0 : i32
    return %c0_i32, %c0_i32_0 : i32, i32
  }
  func.func @transform_3(%arg0: i32) -> (i32, i32) {
    %c0_i32 = arith.constant 0 : i32
    %c0_i32_0 = arith.constant 0 : i32
    %c0_i32_1 = arith.constant 0 : i32
    return %c0_i32, %c0_i32_0 : i32, i32
  }
  func.func @transform_4(%arg0: i32) -> (i32, i32) {
    %c0_i32 = arith.constant 0 : i32
    %c0_i32_0 = arith.constant 0 : i32
    return %c0_i32, %arg0 : i32, i32
  }
}

</mosaic_0001>

<llo_original>
// kernel: tpu_custom_call.1
$region0: #{tpu_custom_call.1}
  #allocation0 [shape = 'u32[]', space=smem, size = 0x4, offset = 0x4, fixed_abs, tag = 'smem constant byte address 0x4 - core index']
  #allocation1 [shape = 'u32[144,128]{1,0:T(1,128)}', space=vmem, size = 0x12000, scoped, tag = 'internal scratch']
  #allocation2 [shape = 'f32[2,128]{1,0:T(2,128)}', space=vmem, size = 0x400, scoped, tag = 'scratch operand']
  #allocation3 [shape = 'f32[2,128]{1,0:T(2,128)}', space=vmem, size = 0x400, scoped, tag = 'scratch operand']
  #allocation4 [shape = 'f32[1,1]{1,0:T(1,128)S(6)}', space=smem, size = 0x200, scoped, tag = 'scoped memory for tpu_custom_call.1']
  %s0 = inlined_call_operand.hbm [shape: f32[8,2,512], index: 0, kind: input, shape index: {}]
  %s1 = inlined_call_operand.hbm [shape: f32[128,512], index: 1, kind: input, shape index: {}]
  %s2 = inlined_call_operand.vmem [shape: f32[1,128], index: 2, kind: input, shape index: {}]
  %s3 = inlined_call_operand.<no memory space> [shape: f32[1,1], index: 3, kind: input, shape index: {}]
  %s4 = inlined_call_operand.hbm [shape: f32[2,8], index: 4, kind: output, shape index: {}]
  %s5 = sld [smem:[#allocation0]]
  $region38: #{tpu_custom_call.1} parent=0
    _
  %s7 = ssub.s32 1, %s5
  %s8 = scalar_select 0, %s7, %s5
  %9 = sst [smem:[#allocation4]] %s3
  $region1: #{tpu_custom_call.1} parent=0
    #allocation5 [shape = 'u8[32768]{0}', space=vmem, size = 0x8000, scoped, tag = 'input window, operand 0, single buffered']
    #allocation6 [shape = 's32[1]{0}', space=sflag, size = 0x4, scoped, tag = 'scoped memory for tpu_custom_call.1']
    #allocation7 [shape = 's32[1]{0}', space=sflag, size = 0x4, scoped, tag = 'scoped memory for tpu_custom_call.1']
    #allocation8 [shape = 'u8[262144]{0}', space=vmem, size = 0x40000, scoped, tag = 'input window, operand 1, single buffered']
    #allocation9 [shape = 's32[1]{0}', space=sflag, size = 0x4, scoped, tag = 'scoped memory for tpu_custom_call.1']
    #allocation10 [shape = 'u8[1024]{0}', space=vmem, size = 0x400, scoped, tag = 'output window, operand 0, single buffered']
    %10 = vsyncpa [#allocation6], 0
    %11 = vsyncpa [#allocation9], 0
    %12 = vsyncpa [#allocation7], 0
    // Predicated region
    $region2: #{tpu_custom_call.1} parent=1 // pred_check
      _
    $region3: #{tpu_custom_call.1} parent=1 // pred_check_branch
      %14 = sbr.rel (0) target = $region5
    $region4: #{tpu_custom_call.1} parent=1 // pred_region
      %s16 = ssub.s32 1024, 1024
      %17 = vsyncadd [#allocation6], %s16
      %s18 = sshll.u32 [#allocation5], 4
      %s19 = int_to_ptr.vmem [resolvable:$true] %s18
      %24 = dma.hbm_to_vmem [thread:$0]  %s0, 1024, %s19, [#allocation6], 128, 128, 8
    $region5: #{tpu_custom_call.1} parent=1 // pred_fallthru
      _
    // Predicated region
    $region6: #{tpu_custom_call.1} parent=1 // pred_check
      _
    $region7: #{tpu_custom_call.1} parent=1 // pred_check_branch
      %26 = sbr.rel (0) target = $region9
    $region8: #{tpu_custom_call.1} parent=1 // pred_region
      %s28 = ssub.s32 8192, 8192
      %29 = vsyncadd [#allocation9], %s28
      %s30 = sshll.u32 [#allocation8], 4
      %s31 = int_to_ptr.vmem [resolvable:$true] %s30
      %36 = dma.hbm_to_vmem [thread:$0]  %s1, 8192, %s31, [#allocation9], 512, 512, 32
    $region9: #{tpu_custom_call.1} parent=1 // pred_fallthru
      _
    // Predicated region
    $region10: #{tpu_custom_call.1} parent=1 // pred_check
      _
    $region11: #{tpu_custom_call.1} parent=1 // pred_check_branch
      %38 = sbr.rel (0) target = $region13
    $region12: #{tpu_custom_call.1} parent=1 // pred_region
      _
    $region13: #{tpu_custom_call.1} parent=1 // pred_fallthru
      _
    // Predicated region
    $region14: #{tpu_custom_call.1} parent=1 // pred_check
      _
    $region15: #{tpu_custom_call.1} parent=1 // pred_check_branch
      %40 = sbr.rel (0) target = $region17
    $region16: #{tpu_custom_call.1} parent=1 // pred_region
      _
    $region17: #{tpu_custom_call.1} parent=1 // pred_fallthru
      _
    // Predicated region
    $region18: #{tpu_custom_call.1} parent=1 // pred_check
      _
    $region19: #{tpu_custom_call.1} parent=1 // pred_check_branch
      %42 = sbr.rel (0) target = $region21
    $region20: #{tpu_custom_call.1} parent=1 // pred_region
      %43 = dma.done [#allocation6], 1024
    $region21: #{tpu_custom_call.1} parent=1 // pred_fallthru
      _
    // Predicated region
    $region22: #{tpu_custom_call.1} parent=1 // pred_check
      _
    $region23: #{tpu_custom_call.1} parent=1 // pred_check_branch
      %45 = sbr.rel (0) target = $region25
    $region24: #{tpu_custom_call.1} parent=1 // pred_region
      %46 = dma.done [#allocation9], 8192
    $region25: #{tpu_custom_call.1} parent=1 // pred_fallthru
      _
    %p47 = scmp.eq.s32.totalorder 0, 0
    // Predicated region
    $region26: #{tpu_custom_call.1} parent=1 // pred_check
      %p48 = pneg %p47
    $region27: #{tpu_custom_call.1} parent=1 // pred_check_branch
      %50 = sbr.rel (%p48) target = $region29
    $region28: #{tpu_custom_call.1} parent=1 // pred_region
      %51 = vst [vmem:[#allocation2] sm:$0x3] 0.0
      %52 = vst [vmem:[#allocation3] sm:$0x3] 0.0
    $region29: #{tpu_custom_call.1} parent=1 // pred_fallthru
      _
    %v53 = vld [vmem:[#allocation8] sm:$0xff]
    %v54 = vld [vmem:[#allocation8 + $0x8] sm:$0xff]
    %v55 = vld [vmem:[#allocation8 + $0x10] sm:$0xff]
    %v56 = vld [vmem:[#allocation8 + $0x18] sm:$0xff]
    %v57 = vld [vmem:[#allocation8 + $0x20] sm:$0xff]
    %v58 = vld [vmem:[#allocation8 + $0x28] sm:$0xff]
    %v59 = vld [vmem:[#allocation8 + $0x30] sm:$0xff]
    %v60 = vld [vmem:[#allocation8 + $0x38] sm:$0xff]
    %v61 = vld [vmem:[#allocation8 + $0x40] sm:$0xff]
    %v62 = vld [vmem:[#allocation8 + $0x48] sm:$0xff]
    %v63 = vld [vmem:[#allocation8 + $0x50] sm:$0xff]
    %v64 = vld [vmem:[#allocation8 + $0x58] sm:$0xff]
    %v65 = vld [vmem:[#allocation8 + $0x60] sm:$0xff]
    %v66 = vld [vmem:[#allocation8 + $0x68] sm:$0xff]
    %v67 = vld [vmem:[#allocation8 + $0x70] sm:$0xff]
    %v68 = vld [vmem:[#allocation8 + $0x78] sm:$0xff]
    %v69 = vld [vmem:[#allocation8 + $0x80] sm:$0xff]
    %v70 = vld [vmem:[#allocation8 + $0x88] sm:$0xff]
    %v71 = vld [vmem:[#allocation8 + $0x90] sm:$0xff]
    %v72 = vld [vmem:[#allocation8 + $0x98] sm:$0xff]
    %v73 = vld [vmem:[#allocation8 + $0xa0] sm:$0xff]
    %v74 = vld [vmem:[#allocation8 + $0xa8] sm:$0xff]
    %v75 = vld [vmem:[#allocation8 + $0xb0] sm:$0xff]
    %v76 = vld [vmem:[#allocation8 + $0xb8] sm:$0xff]
    %v77 = vld [vmem:[#allocation8 + $0xc0] sm:$0xff]
    %v78 = vld [vmem:[#allocation8 + $0xc8] sm:$0xff]
    %v79 = vld [vmem:[#allocation8 + $0xd0] sm:$0xff]
    %v80 = vld [vmem:[#allocation8 + $0xd8] sm:$0xff]
    %v81 = vld [vmem:[#allocation8 + $0xe0] sm:$0xff]
    %v82 = vld [vmem:[#allocation8 + $0xe8] sm:$0xff]
    %v83 = vld [vmem:[#allocation8 + $0xf0] sm:$0xff]
    %v84 = vld [vmem:[#allocation8 + $0xf8] sm:$0xff]
    %v85 = vld [vmem:[#allocation8 + $0x100] sm:$0xff]
    %v86 = vld [vmem:[#allocation8 + $0x108] sm:$0xff]
    %v87 = vld [vmem:[#allocation8 + $0x110] sm:$0xff]
    %v88 = vld [vmem:[#allocation8 + $0x118] sm:$0xff]
    %v89 = vld [vmem:[#allocation8 + $0x120] sm:$0xff]
    %v90 = vld [vmem:[#allocation8 + $0x128] sm:$0xff]
    %v91 = vld [vmem:[#allocation8 + $0x130] sm:$0xff]
    %v92 = vld [vmem:[#allocation8 + $0x138] sm:$0xff]
    %v93 = vld [vmem:[#allocation8 + $0x140] sm:$0xff]
    %v94 = vld [vmem:[#allocation8 + $0x148] sm:$0xff]
    %v95 = vld [vmem:[#allocation8 + $0x150] sm:$0xff]
    %v96 = vld [vmem:[#allocation8 + $0x158] sm:$0xff]
    %v97 = vld [vmem:[#allocation8 + $0x160] sm:$0xff]
    %v98 = vld [vmem:[#allocation8 + $0x168] sm:$0xff]
    %v99 = vld [vmem:[#allocation8 + $0x170] sm:$0xff]
    %v100 = vld [vmem:[#allocation8 + $0x178] sm:$0xff]
    %v101 = vld [vmem:[#allocation8 + $0x180] sm:$0xff]
    %v102 = vld [vmem:[#allocation8 + $0x188] sm:$0xff]
    %v103 = vld [vmem:[#allocation8 + $0x190] sm:$0xff]
    %v104 = vld [vmem:[#allocation8 + $0x198] sm:$0xff]
    %v105 = vld [vmem:[#allocation8 + $0x1a0] sm:$0xff]
    %v106 = vld [vmem:[#allocation8 + $0x1a8] sm:$0xff]
    %v107 = vld [vmem:[#allocation8 + $0x1b0] sm:$0xff]
    %v108 = vld [vmem:[#allocation8 + $0x1b8] sm:$0xff]
    %v109 = vld [vmem:[#allocation8 + $0x1c0] sm:$0xff]
    %v110 = vld [vmem:[#allocation8 + $0x1c8] sm:$0xff]
    %v111 = vld [vmem:[#allocation8 + $0x1d0] sm:$0xff]
    %v112 = vld [vmem:[#allocation8 + $0x1d8] sm:$0xff]
    %v113 = vld [vmem:[#allocation8 + $0x1e0] sm:$0xff]
    %v114 = vld [vmem:[#allocation8 + $0x1e8] sm:$0xff]
    %v115 = vld [vmem:[#allocation8 + $0x1f0] sm:$0xff]
    %v116 = vld [vmem:[#allocation8 + $0x1f8] sm:$0xff]
    %v117 = vld [vmem:[%s2] sm:$0x1]
    %s118 = sld [smem:[#allocation4]]
    %v119 = vld [vmem:[#allocation2] sm:$0x3]
    %v120 = vld [vmem:[#allocation3] sm:$0x3]
    %v121 = vld [vmem:[#allocation5] sm:$0xff]
    %122 = vmatprep.subr.mxu0 %v114
    %123 = vmatpush1.msra.mxu0 %v113
    %124 = vmatprep.subr.mxu0 %v110
    %125 = vmatpush1.msra.mxu0 %v109
    %126 = vmatprep.subr.mxu0 %v106
    %127 = vmatpush1.msra.mxu0 %v105
    %128 = vmatprep.subr.mxu0 %v102
    %129 = vmatpush1.msra.mxu0 %v101
    %130 = vmatprep.subr.mxu0 %v98
    %131 = vmatpush1.msra.mxu0 %v97
    %132 = vmatprep.subr.mxu0 %v94
    %133 = vmatpush1.msra.mxu0 %v93
    %134 = vmatprep.subr.mxu0 %v90
    %135 = vmatpush1.msra.mxu0 %v89
    %136 = vmatprep.subr.mxu0 %v86
    %137 = vmatpush1.msra.mxu0 %v85
    %138 = vmatprep.subr.mxu0 %v82
    %139 = vmatpush1.msra.mxu0 %v81
    %140 = vmatprep.subr.mxu0 %v78
    %141 = vmatpush1.msra.mxu0 %v77
    %142 = vmatprep.subr.mxu0 %v74
    %143 = vmatpush1.msra.mxu0 %v73
    %144 = vmatprep.subr.mxu0 %v70
    %145 = vmatpush1.msra.mxu0 %v69
    %146 = vmatprep.subr.mxu0 %v66
    %147 = vmatpush1.msra.mxu0 %v65
    %148 = vmatprep.subr.mxu0 %v62
    %149 = vmatpush1.msra.mxu0 %v61
    %150 = vmatprep.subr.mxu0 %v58
    %151 = vmatpush1.msra.mxu0 %v57
    %152 = vmatprep.subr.mxu0 %v54
    %153 = vmatpush1.msra.mxu0 %v53
    %154 = vmatprep.subr.mxu0 0.0
    %155 = vmatpush2.msra.mxu0 0.0
    %156 = vmatprep.subr.mxu0 0.0
    %157 = vmatpush2.msra.mxu0 0.0
    %158 = vmatprep.subr.mxu0 0.0
    %159 = vmatpush2.msra.mxu0 0.0
    %160 = vmatprep.subr.mxu0 0.0
    %161 = vmatpush2.msra.mxu0 0.0
    %162 = vmatprep.subr.mxu0 0.0
    %163 = vmatpush2.msra.mxu0 0.0
    %164 = vmatprep.subr.mxu0 0.0
    %165 = vmatpush2.msra.mxu0 0.0
    %166 = vmatprep.subr.mxu0 0.0
    %167 = vmatpush2.msra.mxu0 0.0
    %168 = vmatprep.subr.mxu0 0.0
    %169 = vmatpush2.msra.mxu0 0.0
    %170 = vmatprep.subr.mxu0 0.0
    %171 = vmatpush2.msra.mxu0 0.0
    %172 = vmatprep.subr.mxu0 0.0
    %173 = vmatpush2.msra.mxu0 0.0
    %174 = vmatprep.subr.mxu0 0.0
    %175 = vmatpush2.msra.mxu0 0.0
    %176 = vmatprep.subr.mxu0 0.0
    %177 = vmatpush2.msra.mxu0 0.0
    %178 = vmatprep.subr.mxu0 0.0
    %179 = vmatpush2.msra.mxu0 0.0
    %180 = vmatprep.subr.mxu0 0.0
    %181 = vmatpush2.msra.mxu0 0.0
    %182 = vmatprep.subr.mxu0 0.0
    %183 = vmatpush2.msra.mxu0 0.0
    %184 = vmatprep.subr.mxu0 0.0
    %185 = vmatpush2.msra.mxu0 0.0
    %186 = vmatprep.mubr.f32.mxu0 0.0
    %187 = vmatmul.mubr.f32.gmra.mxu0 %v119
    %v188 = vpop.f32.mrf.mxu0
    %v189 = vadd.f32 0.0, %v188
    %v190 = vpop.f32.mrf.mxu0
    %v191 = vadd.f32 0.0, %v190
    %192 = vdwg.mxu0
    %193 = vmatprep.subr.mxu0 %v116
    %194 = vmatpush1.msra.mxu0 %v115
    %195 = vmatprep.subr.mxu0 %v112
    %196 = vmatpush1.msra.mxu0 %v111
    %197 = vmatprep.subr.mxu0 %v108
    %198 = vmatpush1.msra.mxu0 %v107
    %199 = vmatprep.subr.mxu0 %v104
    %200 = vmatpush1.msra.mxu0 %v103
    %201 = vmatprep.subr.mxu0 %v100
    %202 = vmatpush1.msra.mxu0 %v99
    %203 = vmatprep.subr.mxu0 %v96
    %204 = vmatpush1.msra.mxu0 %v95
    %205 = vmatprep.subr.mxu0 %v92
    %206 = vmatpush1.msra.mxu0 %v91
    %207 = vmatprep.subr.mxu0 %v88
    %208 = vmatpush1.msra.mxu0 %v87
    %209 = vmatprep.subr.mxu0 %v84
    %210 = vmatpush1.msra.mxu0 %v83
    %211 = vmatprep.subr.mxu0 %v80
    %212 = vmatpush1.msra.mxu0 %v79
    %213 = vmatprep.subr.mxu0 %v76
    %214 = vmatpush1.msra.mxu0 %v75
    %215 = vmatprep.subr.mxu0 %v72
    %216 = vmatpush1.msra.mxu0 %v71
    %217 = vmatprep.subr.mxu0 %v68
    %218 = vmatpush1.msra.mxu0 %v67
    %219 = vmatprep.subr.mxu0 %v64
    %220 = vmatpush1.msra.mxu0 %v63
    %221 = vmatprep.subr.mxu0 %v60
    %222 = vmatpush1.msra.mxu0 %v59
    %223 = vmatprep.subr.mxu0 %v56
    %224 = vmatpush1.msra.mxu0 %v55
    %225 = vmatprep.subr.mxu0 0.0
    %226 = vmatpush2.msra.mxu0 0.0
    %227 = vmatprep.subr.mxu0 0.0
    %228 = vmatpush2.msra.mxu0 0.0
    %229 = vmatprep.subr.mxu0 0.0
    %230 = vmatpush2.msra.mxu0 0.0
    %231 = vmatprep.subr.mxu0 0.0
    %232 = vmatpush2.msra.mxu0 0.0
    %233 = vmatprep.subr.mxu0 0.0
    %234 = vmatpush2.msra.mxu0 0.0
    %235 = vmatprep.subr.mxu0 0.0
    %236 = vmatpush2.msra.mxu0 0.0
    %237 = vmatprep.subr.mxu0 0.0
    %238 = vmatpush2.msra.mxu0 0.0
    %239 = vmatprep.subr.mxu0 0.0
    %240 = vmatpush2.msra.mxu0 0.0
    %241 = vmatprep.subr.mxu0 0.0
    %242 = vmatpush2.msra.mxu0 0.0
    %243 = vmatprep.subr.mxu0 0.0
    %244 = vmatpush2.msra.mxu0 0.0
    %245 = vmatprep.subr.mxu0 0.0
    %246 = vmatpush2.msra.mxu0 0.0
    %247 = vmatprep.subr.mxu0 0.0
    %248 = vmatpush2.msra.mxu0 0.0
    %249 = vmatprep.subr.mxu0 0.0
    %250 = vmatpush2.msra.mxu0 0.0
    %251 = vmatprep.subr.mxu0 0.0
    %252 = vmatpush2.msra.mxu0 0.0
    %253 = vmatprep.subr.mxu0 0.0
    %254 = vmatpush2.msra.mxu0 0.0
    %255 = vmatprep.subr.mxu0 0.0
    %256 = vmatpush2.msra.mxu0 0.0
    %257 = vmatprep.mubr.f32.mxu0 0.0
    %258 = vmatmul.mubr.f32.gmra.mxu0 %v119
    %v259 = vpop.f32.mrf.mxu0
    %v260 = vadd.f32 0.0, %v259
    %v261 = vpop.f32.mrf.mxu0
    %v262 = vadd.f32 0.0, %v261
    %263 = vdwg.mxu0
    %v268 = vcombine.low %v189, %v191
    %v269 = vcombine.low %v260, %v262
    %v271 = vunpack.c.l.s4 1983009808
    %v272 = vunpack.c.0.s8 %v271
    %v273 = vlaneseq
    %v274 = vshrl.u32 %v273, 7
    %v275 = vsub.s32 %v272, %v274
    %v276 = vrot.slane %v268, %v275
    %v278 = vunpack.c.l.s4 1983009808
    %v279 = vunpack.c.0.s8 %v278
    %v280 = vlaneseq
    %v281 = vshrl.u32 %v280, 7
    %v282 = vsub.s32 %v279, %v281
    %v283 = vrot.slane %v269, %v282
    %v284 = vcombine.low %v276, %v283
    %v286 = vadd.f32 %v121, %v284
    %v287 = vxor.u32 %v286, 2147483648
    %v288 = vmul.f32 %v287, 1.442695
    %v289 = vpow.pop %v288
    %v290 = vadd.f32 %v289, 1.0
    %v291 = vrcp.pop %v290
    %v292 = vmul.f32 1.0, %v291
    %v294 = vrot.slane %v286, 2
    %v296 = vxor.u32 %v294, 2147483648
    %v297 = vmul.f32 %v296, 1.442695
    %v298 = vpow.pop %v297
    %v299 = vadd.f32 %v298, 1.0
    %v300 = vrcp.pop %v299
    %v301 = vmul.f32 1.0, %v300
    %v302 = vrot.slane %v286, 4
    %v304 = vxor.u32 %v302, 2147483648
    %v305 = vmul.f32 %v304, 1.442695
    %v306 = vpow.pop %v305
    %v307 = vadd.f32 %v306, 1.0
    %v308 = vrcp.pop %v307
    %v309 = vmul.f32 1.0, %v308
    %v310 = vrot.slane %v286, 6
    %v312 = vtanh.pop %v310
    %v313 = vmul.f32 %v292, %v120
    %v314 = vmul.f32 %v301, %v312
    %v315 = vadd.f32 %v313, %v314
    %v316 = vtanh.pop %v315
    %v317 = vmul.f32 %v309, %v316
    %v319 = vlaneseq
    %v320 = vshrl.u32 %v319, 7
    %v321 = vsub.s32 0, %v320
    %v322 = vrot.slane %v117, %v321
    %v324 = vmul.f32 %v317, %v322
    %vm325 = vcmask 1041408
    %v326 = vsel %vm325, %v324, 0.0
    %327 = vadd.xlane.f32.xlu0 %v326
    %v328 = vpop.xlane.xlu0 %327
    %v329 = vstv %s118
    %v330 = vadd.f32 %v328, %v329
    %s331 = scalar_lea.vmem [#allocation5], 8
    %v332 = vld [vmem:[%s331] sm:$0xff]
    %333 = vmatprep.subr.mxu0 %v114
    %334 = vmatpush1.msra.mxu0 %v113
    %335 = vmatprep.subr.mxu0 %v110
    %336 = vmatpush1.msra.mxu0 %v109
    %337 = vmatprep.subr.mxu0 %v106
    %338 = vmatpush1.msra.mxu0 %v105
    %339 = vmatprep.subr.mxu0 %v102
    %340 = vmatpush1.msra.mxu0 %v101
    %341 = vmatprep.subr.mxu0 %v98
    %342 = vmatpush1.msra.mxu0 %v97
    %343 = vmatprep.subr.mxu0 %v94
    %344 = vmatpush1.msra.mxu0 %v93
    %345 = vmatprep.subr.mxu0 %v90
    %346 = vmatpush1.msra.mxu0 %v89
    %347 = vmatprep.subr.mxu0 %v86
    %348 = vmatpush1.msra.mxu0 %v85
    %349 = vmatprep.subr.mxu0 %v82
    %350 = vmatpush1.msra.mxu0 %v81
    %351 = vmatprep.subr.mxu0 %v78
    %352 = vmatpush1.msra.mxu0 %v77
    %353 = vmatprep.subr.mxu0 %v74
    %354 = vmatpush1.msra.mxu0 %v73
    %355 = vmatprep.subr.mxu0 %v70
    %356 = vmatpush1.msra.mxu0 %v69
    %357 = vmatprep.subr.mxu0 %v66
    %358 = vmatpush1.msra.mxu0 %v65
    %359 = vmatprep.subr.mxu0 %v62
    %360 = vmatpush1.msra.mxu0 %v61
    %361 = vmatprep.subr.mxu0 %v58
    %362 = vmatpush1.msra.mxu0 %v57
    %363 = vmatprep.subr.mxu0 %v54
    %364 = vmatpush1.msra.mxu0 %v53
    %365 = vmatprep.subr.mxu0 0.0
    %366 = vmatpush2.msra.mxu0 0.0
    %367 = vmatprep.subr.mxu0 0.0
    %368 = vmatpush2.msra.mxu0 0.0
    %369 = vmatprep.subr.mxu0 0.0
    %370 = vmatpush2.msra.mxu0 0.0
    %371 = vmatprep.subr.mxu0 0.0
    %372 = vmatpush2.msra.mxu0 0.0
    %373 = vmatprep.subr.mxu0 0.0
    %374 = vmatpush2.msra.mxu0 0.0
    %375 = vmatprep.subr.mxu0 0.0
    %376 = vmatpush2.msra.mxu0 0.0
    %377 = vmatprep.subr.mxu0 0.0
    %378 = vmatpush2.msra.mxu0 0.0
    %379 = vmatprep.subr.mxu0 0.0
    %380 = vmatpush2.msra.mxu0 0.0
    %381 = vmatprep.subr.mxu0 0.0
    %382 = vmatpush2.msra.mxu0 0.0
    %383 = vmatprep.subr.mxu0 0.0
    %384 = vmatpush2.msra.mxu0 0.0
    %385 = vmatprep.subr.mxu0 0.0
    %386 = vmatpush2.msra.mxu0 0.0
    %387 = vmatprep.subr.mxu0 0.0
    %388 = vmatpush2.msra.mxu0 0.0
    %389 = vmatprep.subr.mxu0 0.0
    %390 = vmatpush2.msra.mxu0 0.0
    %391 = vmatprep.subr.mxu0 0.0
    %392 = vmatpush2.msra.mxu0 0.0
    %393 = vmatprep.subr.mxu0 0.0
    %394 = vmatpush2.msra.mxu0 0.0
    %395 = vmatprep.subr.mxu0 0.0
    %396 = vmatpush2.msra.mxu0 0.0
    %397 = vmatprep.mubr.f32.mxu0 0.0
    %398 = vmatmul.mubr.f32.gmra.mxu0 %v317
    %v399 = vpop.f32.mrf.mxu0
    %v400 = vadd.f32 0.0, %v399
    %v401 = vpop.f32.mrf.mxu0
    %v402 = vadd.f32 0.0, %v401
    %403 = vdwg.mxu0
    %404 = vmatprep.subr.mxu0 %v116
    %405 = vmatpush1.msra.mxu0 %v115
    %406 = vmatprep.subr.mxu0 %v112
    %407 = vmatpush1.msra.mxu0 %v111
    %408 = vmatprep.subr.mxu0 %v108
    %409 = vmatpush1.msra.mxu0 %v107
    %410 = vmatprep.subr.mxu0 %v104
    %411 = vmatpush1.msra.mxu0 %v103
    %412 = vmatprep.subr.mxu0 %v100
    %413 = vmatpush1.msra.mxu0 %v99
    %414 = vmatprep.subr.mxu0 %v96
    %415 = vmatpush1.msra.mxu0 %v95
    %416 = vmatprep.subr.mxu0 %v92
    %417 = vmatpush1.msra.mxu0 %v91
    %418 = vmatprep.subr.mxu0 %v88
    %419 = vmatpush1.msra.mxu0 %v87
    %420 = vmatprep.subr.mxu0 %v84
    %421 = vmatpush1.msra.mxu0 %v83
    %422 = vmatprep.subr.mxu0 %v80
    %423 = vmatpush1.msra.mxu0 %v79
    %424 = vmatprep.subr.mxu0 %v76
    %425 = vmatpush1.msra.mxu0 %v75
    %426 = vmatprep.subr.mxu0 %v72
    %427 = vmatpush1.msra.mxu0 %v71
    %428 = vmatprep.subr.mxu0 %v68
    %429 = vmatpush1.msra.mxu0 %v67
    %430 = vmatprep.subr.mxu0 %v64
    %431 = vmatpush1.msra.mxu0 %v63
    %432 = vmatprep.subr.mxu0 %v60
    %433 = vmatpush1.msra.mxu0 %v59
    %434 = vmatprep.subr.mxu0 %v56
    %435 = vmatpush1.msra.mxu0 %v55
    %436 = vmatprep.subr.mxu0 0.0
    %437 = vmatpush2.msra.mxu0 0.0
    %438 = vmatprep.subr.mxu0 0.0
    %439 = vmatpush2.msra.mxu0 0.0
    %440 = vmatprep.subr.mxu0 0.0
    %441 = vmatpush2.msra.mxu0 0.0
    %442 = vmatprep.subr.mxu0 0.0
    %443 = vmatpush2.msra.mxu0 0.0
    %444 = vmatprep.subr.mxu0 0.0
    %445 = vmatpush2.msra.mxu0 0.0
    %446 = vmatprep.subr.mxu0 0.0
    %447 = vmatpush2.msra.mxu0 0.0
    %448 = vmatprep.subr.mxu0 0.0
    %449 = vmatpush2.msra.mxu0 0.0
    %450 = vmatprep.subr.mxu0 0.0
    %451 = vmatpush2.msra.mxu0 0.0
    %452 = vmatprep.subr.mxu0 0.0
    %453 = vmatpush2.msra.mxu0 0.0
    %454 = vmatprep.subr.mxu0 0.0
    %455 = vmatpush2.msra.mxu0 0.0
    %456 = vmatprep.subr.mxu0 0.0
    %457 = vmatpush2.msra.mxu0 0.0
    %458 = vmatprep.subr.mxu0 0.0
    %459 = vmatpush2.msra.mxu0 0.0
    %460 = vmatprep.subr.mxu0 0.0
    %461 = vmatpush2.msra.mxu0 0.0
    %462 = vmatprep.subr.mxu0 0.0
    %463 = vmatpush2.msra.mxu0 0.0
    %464 = vmatprep.subr.mxu0 0.0
    %465 = vmatpush2.msra.mxu0 0.0
    %466 = vmatprep.subr.mxu0 0.0
    %467 = vmatpush2.msra.mxu0 0.0
    %468 = vmatprep.mubr.f32.mxu0 0.0
    %469 = vmatmul.mubr.f32.gmra.mxu0 %v317
    %v470 = vpop.f32.mrf.mxu0
    %v471 = vadd.f32 0.0, %v470
    %v472 = vpop.f32.mrf.mxu0
    %v473 = vadd.f32 0.0, %v472
    %474 = vdwg.mxu0
    %v479 = vcombine.low %v400, %v402
    %v480 = vcombine.low %v471, %v473
    %v482 = vunpack.c.l.s4 1983009808
    %v483 = vunpack.c.0.s8 %v482
    %v484 = vlaneseq
    %v485 = vshrl.u32 %v484, 7
    %v486 = vsub.s32 %v483, %v485
    %v487 = vrot.slane %v479, %v486
    %v489 = vunpack.c.l.s4 1983009808
    %v490 = vunpack.c.0.s8 %v489
    %v491 = vlaneseq
    %v492 = vshrl.u32 %v491, 7
    %v493 = vsub.s32 %v490, %v492
    %v494 = vrot.slane %v480, %v493
    %v495 = vcombine.low %v487, %v494
    %v497 = vadd.f32 %v332, %v495
    %v498 = vxor.u32 %v497, 2147483648
    %v499 = vmul.f32 %v498, 1.442695
    %v500 = vpow.pop %v499
    %v501 = vadd.f32 %v500, 1.0
    %v502 = vrcp.pop %v501
    %v503 = vmul.f32 1.0, %v502
    %v505 = vrot.slane %v497, 2
    %v507 = vxor.u32 %v505, 2147483648
    %v508 = vmul.f32 %v507, 1.442695
    %v509 = vpow.pop %v508
    %v510 = vadd.f32 %v509, 1.0
    %v511 = vrcp.pop %v510
    %v512 = vmul.f32 1.0, %v511
    %v513 = vrot.slane %v497, 4
    %v515 = vxor.u32 %v513, 2147483648
    %v516 = vmul.f32 %v515, 1.442695
    %v517 = vpow.pop %v516
    %v518 = vadd.f32 %v517, 1.0
    %v519 = vrcp.pop %v518
    %v520 = vmul.f32 1.0, %v519
    %v521 = vrot.slane %v497, 6
    %v523 = vtanh.pop %v521
    %v524 = vmul.f32 %v503, %v315
    %v525 = vmul.f32 %v512, %v523
    %v526 = vadd.f32 %v524, %v525
    %v527 = vtanh.pop %v526
    %v528 = vmul.f32 %v520, %v527
    %v529 = vmul.f32 %v528, %v322
    %v530 = vsel %vm325, %v529, 0.0
    %531 = vadd.xlane.f32.xlu0 %v530
    %v532 = vpop.xlane.xlu0 %531
    %v533 = vadd.f32 %v532, %v329
    %s534 = scalar_lea.vmem [#allocation5], 16
    %v535 = vld [vmem:[%s534] sm:$0xff]
    %536 = vmatprep.subr.mxu0 %v114
    %537 = vmatpush1.msra.mxu0 %v113
    %538 = vmatprep.subr.mxu0 %v110
    %539 = vmatpush1.msra.mxu0 %v109
    %540 = vmatprep.subr.mxu0 %v106
    %541 = vmatpush1.msra.mxu0 %v105
    %542 = vmatprep.subr.mxu0 %v102
    %543 = vmatpush1.msra.mxu0 %v101
    %544 = vmatprep.subr.mxu0 %v98
    %545 = vmatpush1.msra.mxu0 %v97
    %546 = vmatprep.subr.mxu0 %v94
    %547 = vmatpush1.msra.mxu0 %v93
    %548 = vmatprep.subr.mxu0 %v90
    %549 = vmatpush1.msra.mxu0 %v89
    %550 = vmatprep.subr.mxu0 %v86
    %551 = vmatpush1.msra.mxu0 %v85
    %552 = vmatprep.subr.mxu0 %v82
    %553 = vmatpush1.msra.mxu0 %v81
    %554 = vmatprep.subr.mxu0 %v78
    %555 = vmatpush1.msra.mxu0 %v77
    %556 = vmatprep.subr.mxu0 %v74
    %557 = vmatpush1.msra.mxu0 %v73
    %558 = vmatprep.subr.mxu0 %v70
    %559 = vmatpush1.msra.mxu0 %v69
    %560 = vmatprep.subr.mxu0 %v66
    %561 = vmatpush1.msra.mxu0 %v65
    %562 = vmatprep.subr.mxu0 %v62
    %563 = vmatpush1.msra.mxu0 %v61
    %564 = vmatprep.subr.mxu0 %v58
    %565 = vmatpush1.msra.mxu0 %v57
    %566 = vmatprep.subr.mxu0 %v54
    %567 = vmatpush1.msra.mxu0 %v53
    %568 = vmatprep.subr.mxu0 0.0
    %569 = vmatpush2.msra.mxu0 0.0
    %570 = vmatprep.subr.mxu0 0.0
    %571 = vmatpush2.msra.mxu0 0.0
    %572 = vmatprep.subr.mxu0 0.0
    %573 = vmatpush2.msra.mxu0 0.0
    %574 = vmatprep.subr.mxu0 0.0
    %575 = vmatpush2.msra.mxu0 0.0
    %576 = vmatprep.subr.mxu0 0.0
    %577 = vmatpush2.msra.mxu0 0.0
    %578 = vmatprep.subr.mxu0 0.0
    %579 = vmatpush2.msra.mxu0 0.0
    %580 = vmatprep.subr.mxu0 0.0
    %581 = vmatpush2.msra.mxu0 0.0
    %582 = vmatprep.subr.mxu0 0.0
    %583 = vmatpush2.msra.mxu0 0.0
    %584 = vmatprep.subr.mxu0 0.0
    %585 = vmatpush2.msra.mxu0 0.0
    %586 = vmatprep.subr.mxu0 0.0
    %587 = vmatpush2.msra.mxu0 0.0
    %588 = vmatprep.subr.mxu0 0.0
    %589 = vmatpush2.msra.mxu0 0.0
    %590 = vmatprep.subr.mxu0 0.0
    %591 = vmatpush2.msra.mxu0 0.0
    %592 = vmatprep.subr.mxu0 0.0
    %593 = vmatpush2.msra.mxu0 0.0
    %594 = vmatprep.subr.mxu0 0.0
    %595 = vmatpush2.msra.mxu0 0.0
    %596 = vmatprep.subr.mxu0 0.0
    %597 = vmatpush2.msra.mxu0 0.0
    %598 = vmatprep.subr.mxu0 0.0
    %599 = vmatpush2.msra.mxu0 0.0
    %600 = vmatprep.mubr.f32.mxu0 0.0
    %601 = vmatmul.mubr.f32.gmra.mxu0 %v528
    %v602 = vpop.f32.mrf.mxu0
    %v603 = vadd.f32 0.0, %v602
    %v604 = vpop.f32.mrf.mxu0
    %v605 = vadd.f32 0.0, %v604
    %606 = vdwg.mxu0
    %607 = vmatprep.subr.mxu0 %v116
    %608 = vmatpush1.msra.mxu0 %v115
    %609 = vmatprep.subr.mxu0 %v112
    %610 = vmatpush1.msra.mxu0 %v111
    %611 = vmatprep.subr.mxu0 %v108
    %612 = vmatpush1.msra.mxu0 %v107
    %613 = vmatprep.subr.mxu0 %v104
    %614 = vmatpush1.msra.mxu0 %v103
    %615 = vmatprep.subr.mxu0 %v100
    %616 = vmatpush1.msra.mxu0 %v99
    %617 = vmatprep.subr.mxu0 %v96
    %618 = vmatpush1.msra.mxu0 %v95
    %619 = vmatprep.subr.mxu0 %v92
    %620 = vmatpush1.msra.mxu0 %v91
    %621 = vmatprep.subr.mxu0 %v88
    %622 = vmatpush1.msra.mxu0 %v87
    %623 = vmatprep.subr.mxu0 %v84
    %624 = vmatpush1.msra.mxu0 %v83
    %625 = vmatprep.subr.mxu0 %v80
    %626 = vmatpush1.msra.mxu0 %v79
    %627 = vmatprep.subr.mxu0 %v76
    %628 = vmatpush1.msra.mxu0 %v75
    %629 = vmatprep.subr.mxu0 %v72
    %630 = vmatpush1.msra.mxu0 %v71
    %631 = vmatprep.subr.mxu0 %v68
    %632 = vmatpush1.msra.mxu0 %v67
    %633 = vmatprep.subr.mxu0 %v64
    %634 = vmatpush1.msra.mxu0 %v63
    %635 = vmatprep.subr.mxu0 %v60
    %636 = vmatpush1.msra.mxu0 %v59
    %637 = vmatprep.subr.mxu0 %v56
    %638 = vmatpush1.msra.mxu0 %v55
    %639 = vmatprep.subr.mxu0 0.0
    %640 = vmatpush2.msra.mxu0 0.0
    %641 = vmatprep.subr.mxu0 0.0
    %642 = vmatpush2.msra.mxu0 0.0
    %643 = vmatprep.subr.mxu0 0.0
    %644 = vmatpush2.msra.mxu0 0.0
    %645 = vmatprep.subr.mxu0 0.0
    %646 = vmatpush2.msra.mxu0 0.0
    %647 = vmatprep.subr.mxu0 0.0
    %648 = vmatpush2.msra.mxu0 0.0
    %649 = vmatprep.subr.mxu0 0.0
    %650 = vmatpush2.msra.mxu0 0.0
    %651 = vmatprep.subr.mxu0 0.0
    %652 = vmatpush2.msra.mxu0 0.0
    %653 = vmatprep.subr.mxu0 0.0
    %654 = vmatpush2.msra.mxu0 0.0
    %655 = vmatprep.subr.mxu0 0.0
    %656 = vmatpush2.msra.mxu0 0.0
    %657 = vmatprep.subr.mxu0 0.0
    %658 = vmatpush2.msra.mxu0 0.0
    %659 = vmatprep.subr.mxu0 0.0
    %660 = vmatpush2.msra.mxu0 0.0
    %661 = vmatprep.subr.mxu0 0.0
    %662 = vmatpush2.msra.mxu0 0.0
    %663 = vmatprep.subr.mxu0 0.0
    %664 = vmatpush2.msra.mxu0 0.0
    %665 = vmatprep.subr.mxu0 0.0
    %666 = vmatpush2.msra.mxu0 0.0
    %667 = vmatprep.subr.mxu0 0.0
    %668 = vmatpush2.msra.mxu0 0.0
    %669 = vmatprep.subr.mxu0 0.0
    %670 = vmatpush2.msra.mxu0 0.0
    %671 = vmatprep.mubr.f32.mxu0 0.0
    %672 = vmatmul.mubr.f32.gmra.mxu0 %v528
    %v673 = vpop.f32.mrf.mxu0
    %v674 = vadd.f32 0.0, %v673
    %v675 = vpop.f32.mrf.mxu0
    %v676 = vadd.f32 0.0, %v675
    %677 = vdwg.mxu0
    %v682 = vcombine.low %v603, %v605
    %v683 = vcombine.low %v674, %v676
    %v685 = vunpack.c.l.s4 1983009808
    %v686 = vunpack.c.0.s8 %v685
    %v687 = vlaneseq
    %v688 = vshrl.u32 %v687, 7
    %v689 = vsub.s32 %v686, %v688
    %v690 = vrot.slane %v682, %v689
    %v692 = vunpack.c.l.s4 1983009808
    %v693 = vunpack.c.0.s8 %v692
    %v694 = vlaneseq
    %v695 = vshrl.u32 %v694, 7
    %v696 = vsub.s32 %v693, %v695
    %v697 = vrot.slane %v683, %v696
    %v698 = vcombine.low %v690, %v697
    %v700 = vadd.f32 %v535, %v698
    %v701 = vxor.u32 %v700, 2147483648
    %v702 = vmul.f32 %v701, 1.442695
    %v703 = vpow.pop %v702
    %v704 = vadd.f32 %v703, 1.0
    %v705 = vrcp.pop %v704
    %v706 = vmul.f32 1.0, %v705
    %v708 = vrot.slane %v700, 2
    %v710 = vxor.u32 %v708, 2147483648
    %v711 = vmul.f32 %v710, 1.442695
    %v712 = vpow.pop %v711
    %v713 = vadd.f32 %v712, 1.0
    %v714 = vrcp.pop %v713
    %v715 = vmul.f32 1.0, %v714
    %v716 = vrot.slane %v700, 4
    %v718 = vxor.u32 %v716, 2147483648
    %v719 = vmul.f32 %v718, 1.442695
    %v720 = vpow.pop %v719
    %v721 = vadd.f32 %v720, 1.0
    %v722 = vrcp.pop %v721
    %v723 = vmul.f32 1.0, %v722
    %v724 = vrot.slane %v700, 6
    %v726 = vtanh.pop %v724
    %v727 = vmul.f32 %v706, %v526
    %v728 = vmul.f32 %v715, %v726
    %v729 = vadd.f32 %v727, %v728
    %v730 = vtanh.pop %v729
    %v731 = vmul.f32 %v723, %v730
    %v732 = vmul.f32 %v731, %v322
    %v733 = vsel %vm325, %v732, 0.0
    %734 = vadd.xlane.f32.xlu0 %v733
    %v735 = vpop.xlane.xlu0 %734
    %v736 = vadd.f32 %v735, %v329
    %s737 = scalar_lea.vmem [#allocation5], 24
    %v738 = vld [vmem:[%s737] sm:$0xff]
    %739 = vmatprep.subr.mxu0 %v114
    %740 = vmatpush1.msra.mxu0 %v113
    %741 = vmatprep.subr.mxu0 %v110
    %742 = vmatpush1.msra.mxu0 %v109
    %743 = vmatprep.subr.mxu0 %v106
    %744 = vmatpush1.msra.mxu0 %v105
    %745 = vmatprep.subr.mxu0 %v102
    %746 = vmatpush1.msra.mxu0 %v101
    %747 = vmatprep.subr.mxu0 %v98
    %748 = vmatpush1.msra.mxu0 %v97
    %749 = vmatprep.subr.mxu0 %v94
    %750 = vmatpush1.msra.mxu0 %v93
    %751 = vmatprep.subr.mxu0 %v90
    %752 = vmatpush1.msra.mxu0 %v89
    %753 = vmatprep.subr.mxu0 %v86
    %754 = vmatpush1.msra.mxu0 %v85
    %755 = vmatprep.subr.mxu0 %v82
    %756 = vmatpush1.msra.mxu0 %v81
    %757 = vmatprep.subr.mxu0 %v78
    %758 = vmatpush1.msra.mxu0 %v77
    %759 = vmatprep.subr.mxu0 %v74
    %760 = vmatpush1.msra.mxu0 %v73
    %761 = vmatprep.subr.mxu0 %v70
    %762 = vmatpush1.msra.mxu0 %v69
    %763 = vmatprep.subr.mxu0 %v66
    %764 = vmatpush1.msra.mxu0 %v65
    %765 = vmatprep.subr.mxu0 %v62
    %766 = vmatpush1.msra.mxu0 %v61
    %767 = vmatprep.subr.mxu0 %v58
    %768 = vmatpush1.msra.mxu0 %v57
    %769 = vmatprep.subr.mxu0 %v54
    %770 = vmatpush1.msra.mxu0 %v53
    %771 = vmatprep.subr.mxu0 0.0
    %772 = vmatpush2.msra.mxu0 0.0
    %773 = vmatprep.subr.mxu0 0.0
    %774 = vmatpush2.msra.mxu0 0.0
    %775 = vmatprep.subr.mxu0 0.0
    %776 = vmatpush2.msra.mxu0 0.0
    %777 = vmatprep.subr.mxu0 0.0
    %778 = vmatpush2.msra.mxu0 0.0
    %779 = vmatprep.subr.mxu0 0.0
    %780 = vmatpush2.msra.mxu0 0.0
    %781 = vmatprep.subr.mxu0 0.0
    %782 = vmatpush2.msra.mxu0 0.0
    %783 = vmatprep.subr.mxu0 0.0
    %784 = vmatpush2.msra.mxu0 0.0
    %785 = vmatprep.subr.mxu0 0.0
    %786 = vmatpush2.msra.mxu0 0.0
    %787 = vmatprep.subr.mxu0 0.0
    %788 = vmatpush2.msra.mxu0 0.0
    %789 = vmatprep.subr.mxu0 0.0
    %790 = vmatpush2.msra.mxu0 0.0
    %791 = vmatprep.subr.mxu0 0.0
    %792 = vmatpush2.msra.mxu0 0.0
    %793 = vmatprep.subr.mxu0 0.0
    %794 = vmatpush2.msra.mxu0 0.0
    %795 = vmatprep.subr.mxu0 0.0
    %796 = vmatpush2.msra.mxu0 0.0
    %797 = vmatprep.subr.mxu0 0.0
    %798 = vmatpush2.msra.mxu0 0.0
    %799 = vmatprep.subr.mxu0 0.0
    %800 = vmatpush2.msra.mxu0 0.0
    %801 = vmatprep.subr.mxu0 0.0
    %802 = vmatpush2.msra.mxu0 0.0
    %803 = vmatprep.mubr.f32.mxu0 0.0
    %804 = vmatmul.mubr.f32.gmra.mxu0 %v731
    %v805 = vpop.f32.mrf.mxu0
    %v806 = vadd.f32 0.0, %v805
    %v807 = vpop.f32.mrf.mxu0
    %v808 = vadd.f32 0.0, %v807
    %809 = vdwg.mxu0
    %810 = vmatprep.subr.mxu0 %v116
    %811 = vmatpush1.msra.mxu0 %v115
    %812 = vmatprep.subr.mxu0 %v112
    %813 = vmatpush1.msra.mxu0 %v111
    %814 = vmatprep.subr.mxu0 %v108
    %815 = vmatpush1.msra.mxu0 %v107
    %816 = vmatprep.subr.mxu0 %v104
    %817 = vmatpush1.msra.mxu0 %v103
    %818 = vmatprep.subr.mxu0 %v100
    %819 = vmatpush1.msra.mxu0 %v99
    %820 = vmatprep.subr.mxu0 %v96
    %821 = vmatpush1.msra.mxu0 %v95
    %822 = vmatprep.subr.mxu0 %v92
    %823 = vmatpush1.msra.mxu0 %v91
    %824 = vmatprep.subr.mxu0 %v88
    %825 = vmatpush1.msra.mxu0 %v87
    %826 = vmatprep.subr.mxu0 %v84
    %827 = vmatpush1.msra.mxu0 %v83
    %828 = vmatprep.subr.mxu0 %v80
    %829 = vmatpush1.msra.mxu0 %v79
    %830 = vmatprep.subr.mxu0 %v76
    %831 = vmatpush1.msra.mxu0 %v75
    %832 = vmatprep.subr.mxu0 %v72
    %833 = vmatpush1.msra.mxu0 %v71
    %834 = vmatprep.subr.mxu0 %v68
    %835 = vmatpush1.msra.mxu0 %v67
    %836 = vmatprep.subr.mxu0 %v64
    %837 = vmatpush1.msra.mxu0 %v63
    %838 = vmatprep.subr.mxu0 %v60
    %839 = vmatpush1.msra.mxu0 %v59
    %840 = vmatprep.subr.mxu0 %v56
    %841 = vmatpush1.msra.mxu0 %v55
    %842 = vmatprep.subr.mxu0 0.0
    %843 = vmatpush2.msra.mxu0 0.0
    %844 = vmatprep.subr.mxu0 0.0
    %845 = vmatpush2.msra.mxu0 0.0
    %846 = vmatprep.subr.mxu0 0.0
    %847 = vmatpush2.msra.mxu0 0.0
    %848 = vmatprep.subr.mxu0 0.0
    %849 = vmatpush2.msra.mxu0 0.0
    %850 = vmatprep.subr.mxu0 0.0
    %851 = vmatpush2.msra.mxu0 0.0
    %852 = vmatprep.subr.mxu0 0.0
    %853 = vmatpush2.msra.mxu0 0.0
    %854 = vmatprep.subr.mxu0 0.0
    %855 = vmatpush2.msra.mxu0 0.0
    %856 = vmatprep.subr.mxu0 0.0
    %857 = vmatpush2.msra.mxu0 0.0
    %858 = vmatprep.subr.mxu0 0.0
    %859 = vmatpush2.msra.mxu0 0.0
    %860 = vmatprep.subr.mxu0 0.0
    %861 = vmatpush2.msra.mxu0 0.0
    %862 = vmatprep.subr.mxu0 0.0
    %863 = vmatpush2.msra.mxu0 0.0
    %864 = vmatprep.subr.mxu0 0.0
    %865 = vmatpush2.msra.mxu0 0.0
    %866 = vmatprep.subr.mxu0 0.0
    %867 = vmatpush2.msra.mxu0 0.0
    %868 = vmatprep.subr.mxu0 0.0
    %869 = vmatpush2.msra.mxu0 0.0
    %870 = vmatprep.subr.mxu0 0.0
    %871 = vmatpush2.msra.mxu0 0.0
    %872 = vmatprep.subr.mxu0 0.0
    %873 = vmatpush2.msra.mxu0 0.0
    %874 = vmatprep.mubr.f32.mxu0 0.0
    %875 = vmatmul.mubr.f32.gmra.mxu0 %v731
    %v876 = vpop.f32.mrf.mxu0
    %v877 = vadd.f32 0.0, %v876
    %v878 = vpop.f32.mrf.mxu0
    %v879 = vadd.f32 0.0, %v878
    %880 = vdwg.mxu0
    %v885 = vcombine.low %v806, %v808
    %v886 = vcombine.low %v877, %v879
    %v888 = vunpack.c.l.s4 1983009808
    %v889 = vunpack.c.0.s8 %v888
    %v890 = vlaneseq
    %v891 = vshrl.u32 %v890, 7
    %v892 = vsub.s32 %v889, %v891
    %v893 = vrot.slane %v885, %v892
    %v895 = vunpack.c.l.s4 1983009808
    %v896 = vunpack.c.0.s8 %v895
    %v897 = vlaneseq
    %v898 = vshrl.u32 %v897, 7
    %v899 = vsub.s32 %v896, %v898
    %v900 = vrot.slane %v886, %v899
    %v901 = vcombine.low %v893, %v900
    %v903 = vadd.f32 %v738, %v901
    %v904 = vxor.u32 %v903, 2147483648
    %v905 = vmul.f32 %v904, 1.442695
    %v906 = vpow.pop %v905
    %v907 = vadd.f32 %v906, 1.0
    %v908 = vrcp.pop %v907
    %v909 = vmul.f32 1.0, %v908
    %v911 = vrot.slane %v903, 2
    %v913 = vxor.u32 %v911, 2147483648
    %v914 = vmul.f32 %v913, 1.442695
    %v915 = vpow.pop %v914
    %v916 = vadd.f32 %v915, 1.0
    %v917 = vrcp.pop %v916
    %v918 = vmul.f32 1.0, %v917
    %v919 = vrot.slane %v903, 4
    %v921 = vxor.u32 %v919, 2147483648
    %v922 = vmul.f32 %v921, 1.442695
    %v923 = vpow.pop %v922
    %v924 = vadd.f32 %v923, 1.0
    %v925 = vrcp.pop %v924
    %v926 = vmul.f32 1.0, %v925
    %v927 = vrot.slane %v903, 6
    %v929 = vtanh.pop %v927
    %v930 = vmul.f32 %v909, %v729
    %v931 = vmul.f32 %v918, %v929
    %v932 = vadd.f32 %v930, %v931
    %v933 = vtanh.pop %v932
    %v934 = vmul.f32 %v926, %v933
    %v935 = vmul.f32 %v934, %v322
    %v936 = vsel %vm325, %v935, 0.0
    %937 = vadd.xlane.f32.xlu0 %v936
    %v938 = vpop.xlane.xlu0 %937
    %v939 = vadd.f32 %v938, %v329
    %s940 = scalar_lea.vmem [#allocation5], 32
    %v941 = vld [vmem:[%s940] sm:$0xff]
    %942 = vmatprep.subr.mxu0 %v114
    %943 = vmatpush1.msra.mxu0 %v113
    %944 = vmatprep.subr.mxu0 %v110
    %945 = vmatpush1.msra.mxu0 %v109
    %946 = vmatprep.subr.mxu0 %v106
    %947 = vmatpush1.msra.mxu0 %v105
    %948 = vmatprep.subr.mxu0 %v102
    %949 = vmatpush1.msra.mxu0 %v101
    %950 = vmatprep.subr.mxu0 %v98
    %951 = vmatpush1.msra.mxu0 %v97
    %952 = vmatprep.subr.mxu0 %v94
    %953 = vmatpush1.msra.mxu0 %v93
    %954 = vmatprep.subr.mxu0 %v90
    %955 = vmatpush1.msra.mxu0 %v89
    %956 = vmatprep.subr.mxu0 %v86
    %957 = vmatpush1.msra.mxu0 %v85
    %958 = vmatprep.subr.mxu0 %v82
    %959 = vmatpush1.msra.mxu0 %v81
    %960 = vmatprep.subr.mxu0 %v78
    %961 = vmatpush1.msra.mxu0 %v77
    %962 = vmatprep.subr.mxu0 %v74
    %963 = vmatpush1.msra.mxu0 %v73
    %964 = vmatprep.subr.mxu0 %v70
    %965 = vmatpush1.msra.mxu0 %v69
    %966 = vmatprep.subr.mxu0 %v66
    %967 = vmatpush1.msra.mxu0 %v65
    %968 = vmatprep.subr.mxu0 %v62
    %969 = vmatpush1.msra.mxu0 %v61
    %970 = vmatprep.subr.mxu0 %v58
    %971 = vmatpush1.msra.mxu0 %v57
    %972 = vmatprep.subr.mxu0 %v54
    %973 = vmatpush1.msra.mxu0 %v53
    %974 = vmatprep.subr.mxu0 0.0
    %975 = vmatpush2.msra.mxu0 0.0
    %976 = vmatprep.subr.mxu0 0.0
    %977 = vmatpush2.msra.mxu0 0.0
    %978 = vmatprep.subr.mxu0 0.0
    %979 = vmatpush2.msra.mxu0 0.0
    %980 = vmatprep.subr.mxu0 0.0
    %981 = vmatpush2.msra.mxu0 0.0
    %982 = vmatprep.subr.mxu0 0.0
    %983 = vmatpush2.msra.mxu0 0.0
    %984 = vmatprep.subr.mxu0 0.0
    %985 = vmatpush2.msra.mxu0 0.0
    %986 = vmatprep.subr.mxu0 0.0
    %987 = vmatpush2.msra.mxu0 0.0
    %988 = vmatprep.subr.mxu0 0.0
    %989 = vmatpush2.msra.mxu0 0.0
    %990 = vmatprep.subr.mxu0 0.0
    %991 = vmatpush2.msra.mxu0 0.0
    %992 = vmatprep.subr.mxu0 0.0
    %993 = vmatpush2.msra.mxu0 0.0
    %994 = vmatprep.subr.mxu0 0.0
    %995 = vmatpush2.msra.mxu0 0.0
    %996 = vmatprep.subr.mxu0 0.0
    %997 = vmatpush2.msra.mxu0 0.0
    %998 = vmatprep.subr.mxu0 0.0
    %999 = vmatpush2.msra.mxu0 0.0
    %1000 = vmatprep.subr.mxu0 0.0
    %1001 = vmatpush2.msra.mxu0 0.0
    %1002 = vmatprep.subr.mxu0 0.0
    %1003 = vmatpush2.msra.mxu0 0.0
    %1004 = vmatprep.subr.mxu0 0.0
    %1005 = vmatpush2.msra.mxu0 0.0
    %1006 = vmatprep.mubr.f32.mxu0 0.0
    %1007 = vmatmul.mubr.f32.gmra.mxu0 %v934
    %v1008 = vpop.f32.mrf.mxu0
    %v1009 = vadd.f32 0.0, %v1008
    %v1010 = vpop.f32.mrf.mxu0
    %v1011 = vadd.f32 0.0, %v1010
    %1012 = vdwg.mxu0
    %1013 = vmatprep.subr.mxu0 %v116
    %1014 = vmatpush1.msra.mxu0 %v115
    %1015 = vmatprep.subr.mxu0 %v112
    %1016 = vmatpush1.msra.mxu0 %v111
    %1017 = vmatprep.subr.mxu0 %v108
    %1018 = vmatpush1.msra.mxu0 %v107
    %1019 = vmatprep.subr.mxu0 %v104
    %1020 = vmatpush1.msra.mxu0 %v103
    %1021 = vmatprep.subr.mxu0 %v100
    %1022 = vmatpush1.msra.mxu0 %v99
    %1023 = vmatprep.subr.mxu0 %v96
    %1024 = vmatpush1.msra.mxu0 %v95
    %1025 = vmatprep.subr.mxu0 %v92
    %1026 = vmatpush1.msra.mxu0 %v91
    %1027 = vmatprep.subr.mxu0 %v88
    %1028 = vmatpush1.msra.mxu0 %v87
    %1029 = vmatprep.subr.mxu0 %v84
    %1030 = vmatpush1.msra.mxu0 %v83
    %1031 = vmatprep.subr.mxu0 %v80
    %1032 = vmatpush1.msra.mxu0 %v79
    %1033 = vmatprep.subr.mxu0 %v76
    %1034 = vmatpush1.msra.mxu0 %v75
    %1035 = vmatprep.subr.mxu0 %v72
    %1036 = vmatpush1.msra.mxu0 %v71
    %1037 = vmatprep.subr.mxu0 %v68
    %1038 = vmatpush1.msra.mxu0 %v67
    %1039 = vmatprep.subr.mxu0 %v64
    %1040 = vmatpush1.msra.mxu0 %v63
    %1041 = vmatprep.subr.mxu0 %v60
    %1042 = vmatpush1.msra.mxu0 %v59
    %1043 = vmatprep.subr.mxu0 %v56
    %1044 = vmatpush1.msra.mxu0 %v55
    %1045 = vmatprep.subr.mxu0 0.0
    %1046 = vmatpush2.msra.mxu0 0.0
    %1047 = vmatprep.subr.mxu0 0.0
    %1048 = vmatpush2.msra.mxu0 0.0
    %1049 = vmatprep.subr.mxu0 0.0
    %1050 = vmatpush2.msra.mxu0 0.0
    %1051 = vmatprep.subr.mxu0 0.0
    %1052 = vmatpush2.msra.mxu0 0.0
    %1053 = vmatprep.subr.mxu0 0.0
    %1054 = vmatpush2.msra.mxu0 0.0
    %1055 = vmatprep.subr.mxu0 0.0
    %1056 = vmatpush2.msra.mxu0 0.0
    %1057 = vmatprep.subr.mxu0 0.0
    %1058 = vmatpush2.msra.mxu0 0.0
    %1059 = vmatprep.subr.mxu0 0.0
    %1060 = vmatpush2.msra.mxu0 0.0
    %1061 = vmatprep.subr.mxu0 0.0
    %1062 = vmatpush2.msra.mxu0 0.0
    %1063 = vmatprep.subr.mxu0 0.0
    %1064 = vmatpush2.msra.mxu0 0.0
    %1065 = vmatprep.subr.mxu0 0.0
    %1066 = vmatpush2.msra.mxu0 0.0
    %1067 = vmatprep.subr.mxu0 0.0
    %1068 = vmatpush2.msra.mxu0 0.0
    %1069 = vmatprep.subr.mxu0 0.0
    %1070 = vmatpush2.msra.mxu0 0.0
    %1071 = vmatprep.subr.mxu0 0.0
    %1072 = vmatpush2.msra.mxu0 0.0
    %1073 = vmatprep.subr.mxu0 0.0
    %1074 = vmatpush2.msra.mxu0 0.0
    %1075 = vmatprep.subr.mxu0 0.0
    %1076 = vmatpush2.msra.mxu0 0.0
    %1077 = vmatprep.mubr.f32.mxu0 0.0
    %1078 = vmatmul.mubr.f32.gmra.mxu0 %v934
    %v1079 = vpop.f32.mrf.mxu0
    %v1080 = vadd.f32 0.0, %v1079
    %v1081 = vpop.f32.mrf.mxu0
    %v1082 = vadd.f32 0.0, %v1081
    %1083 = vdwg.mxu0
    %v1088 = vcombine.low %v1009, %v1011
    %v1089 = vcombine.low %v1080, %v1082
    %v1091 = vunpack.c.l.s4 1983009808
    %v1092 = vunpack.c.0.s8 %v1091
    %v1093 = vlaneseq
    %v1094 = vshrl.u32 %v1093, 7
    %v1095 = vsub.s32 %v1092, %v1094
    %v1096 = vrot.slane %v1088, %v1095
    %v1098 = vunpack.c.l.s4 1983009808
    %v1099 = vunpack.c.0.s8 %v1098
    %v1100 = vlaneseq
    %v1101 = vshrl.u32 %v1100, 7
    %v1102 = vsub.s32 %v1099, %v1101
    %v1103 = vrot.slane %v1089, %v1102
    %v1104 = vcombine.low %v1096, %v1103
    %v1106 = vadd.f32 %v941, %v1104
    %v1107 = vxor.u32 %v1106, 2147483648
    %v1108 = vmul.f32 %v1107, 1.442695
    %v1109 = vpow.pop %v1108
    %v1110 = vadd.f32 %v1109, 1.0
    %v1111 = vrcp.pop %v1110
    %v1112 = vmul.f32 1.0, %v1111
    %v1114 = vrot.slane %v1106, 2
    %v1116 = vxor.u32 %v1114, 2147483648
    %v1117 = vmul.f32 %v1116, 1.442695
    %v1118 = vpow.pop %v1117
    %v1119 = vadd.f32 %v1118, 1.0
    %v1120 = vrcp.pop %v1119
    %v1121 = vmul.f32 1.0, %v1120
    %v1122 = vrot.slane %v1106, 4
    %v1124 = vxor.u32 %v1122, 2147483648
    %v1125 = vmul.f32 %v1124, 1.442695
    %v1126 = vpow.pop %v1125
    %v1127 = vadd.f32 %v1126, 1.0
    %v1128 = vrcp.pop %v1127
    %v1129 = vmul.f32 1.0, %v1128
    %v1130 = vrot.slane %v1106, 6
    %v1132 = vtanh.pop %v1130
    %v1133 = vmul.f32 %v1112, %v932
    %v1134 = vmul.f32 %v1121, %v1132
    %v1135 = vadd.f32 %v1133, %v1134
    %v1136 = vtanh.pop %v1135
    %v1137 = vmul.f32 %v1129, %v1136
    %v1138 = vmul.f32 %v1137, %v322
    %v1139 = vsel %vm325, %v1138, 0.0
    %1140 = vadd.xlane.f32.xlu0 %v1139
    %v1141 = vpop.xlane.xlu0 %1140
    %v1142 = vadd.f32 %v1141, %v329
    %s1143 = scalar_lea.vmem [#allocation5], 40
    %v1144 = vld [vmem:[%s1143] sm:$0xff]
    %1145 = vmatprep.subr.mxu0 %v114
    %1146 = vmatpush1.msra.mxu0 %v113
    %1147 = vmatprep.subr.mxu0 %v110
    %1148 = vmatpush1.msra.mxu0 %v109
    %1149 = vmatprep.subr.mxu0 %v106
    %1150 = vmatpush1.msra.mxu0 %v105
    %1151 = vmatprep.subr.mxu0 %v102
    %1152 = vmatpush1.msra.mxu0 %v101
    %1153 = vmatprep.subr.mxu0 %v98
    %1154 = vmatpush1.msra.mxu0 %v97
    %1155 = vmatprep.subr.mxu0 %v94
    %1156 = vmatpush1.msra.mxu0 %v93
    %1157 = vmatprep.subr.mxu0 %v90
    %1158 = vmatpush1.msra.mxu0 %v89
    %1159 = vmatprep.subr.mxu0 %v86
    %1160 = vmatpush1.msra.mxu0 %v85
    %1161 = vmatprep.subr.mxu0 %v82
    %1162 = vmatpush1.msra.mxu0 %v81
    %1163 = vmatprep.subr.mxu0 %v78
    %1164 = vmatpush1.msra.mxu0 %v77
    %1165 = vmatprep.subr.mxu0 %v74
    %1166 = vmatpush1.msra.mxu0 %v73
    %1167 = vmatprep.subr.mxu0 %v70
    %1168 = vmatpush1.msra.mxu0 %v69
    %1169 = vmatprep.subr.mxu0 %v66
    %1170 = vmatpush1.msra.mxu0 %v65
    %1171 = vmatprep.subr.mxu0 %v62
    %1172 = vmatpush1.msra.mxu0 %v61
    %1173 = vmatprep.subr.mxu0 %v58
    %1174 = vmatpush1.msra.mxu0 %v57
    %1175 = vmatprep.subr.mxu0 %v54
    %1176 = vmatpush1.msra.mxu0 %v53
    %1177 = vmatprep.subr.mxu0 0.0
    %1178 = vmatpush2.msra.mxu0 0.0
    %1179 = vmatprep.subr.mxu0 0.0
    %1180 = vmatpush2.msra.mxu0 0.0
    %1181 = vmatprep.subr.mxu0 0.0
    %1182 = vmatpush2.msra.mxu0 0.0
    %1183 = vmatprep.subr.mxu0 0.0
    %1184 = vmatpush2.msra.mxu0 0.0
    %1185 = vmatprep.subr.mxu0 0.0
    %1186 = vmatpush2.msra.mxu0 0.0
    %1187 = vmatprep.subr.mxu0 0.0
    %1188 = vmatpush2.msra.mxu0 0.0
    %1189 = vmatprep.subr.mxu0 0.0
    %1190 = vmatpush2.msra.mxu0 0.0
    %1191 = vmatprep.subr.mxu0 0.0
    %1192 = vmatpush2.msra.mxu0 0.0
    %1193 = vmatprep.subr.mxu0 0.0
    %1194 = vmatpush2.msra.mxu0 0.0
    %1195 = vmatprep.subr.mxu0 0.0
    %1196 = vmatpush2.msra.mxu0 0.0
    %1197 = vmatprep.subr.mxu0 0.0
    %1198 = vmatpush2.msra.mxu0 0.0
    %1199 = vmatprep.subr.mxu0 0.0
    %1200 = vmatpush2.msra.mxu0 0.0
    %1201 = vmatprep.subr.mxu0 0.0
    %1202 = vmatpush2.msra.mxu0 0.0
    %1203 = vmatprep.subr.mxu0 0.0
    %1204 = vmatpush2.msra.mxu0 0.0
    %1205 = vmatprep.subr.mxu0 0.0
    %1206 = vmatpush2.msra.mxu0 0.0
    %1207 = vmatprep.subr.mxu0 0.0
    %1208 = vmatpush2.msra.mxu0 0.0
    %1209 = vmatprep.mubr.f32.mxu0 0.0
    %1210 = vmatmul.mubr.f32.gmra.mxu0 %v1137
    %v1211 = vpop.f32.mrf.mxu0
    %v1212 = vadd.f32 0.0, %v1211
    %v1213 = vpop.f32.mrf.mxu0
    %v1214 = vadd.f32 0.0, %v1213
    %1215 = vdwg.mxu0
    %1216 = vmatprep.subr.mxu0 %v116
    %1217 = vmatpush1.msra.mxu0 %v115
    %1218 = vmatprep.subr.mxu0 %v112
    %1219 = vmatpush1.msra.mxu0 %v111
    %1220 = vmatprep.subr.mxu0 %v108
    %1221 = vmatpush1.msra.mxu0 %v107
    %1222 = vmatprep.subr.mxu0 %v104
    %1223 = vmatpush1.msra.mxu0 %v103
    %1224 = vmatprep.subr.mxu0 %v100
    %1225 = vmatpush1.msra.mxu0 %v99
    %1226 = vmatprep.subr.mxu0 %v96
    %1227 = vmatpush1.msra.mxu0 %v95
    %1228 = vmatprep.subr.mxu0 %v92
    %1229 = vmatpush1.msra.mxu0 %v91
    %1230 = vmatprep.subr.mxu0 %v88
    %1231 = vmatpush1.msra.mxu0 %v87
    %1232 = vmatprep.subr.mxu0 %v84
    %1233 = vmatpush1.msra.mxu0 %v83
    %1234 = vmatprep.subr.mxu0 %v80
    %1235 = vmatpush1.msra.mxu0 %v79
    %1236 = vmatprep.subr.mxu0 %v76
    %1237 = vmatpush1.msra.mxu0 %v75
    %1238 = vmatprep.subr.mxu0 %v72
    %1239 = vmatpush1.msra.mxu0 %v71
    %1240 = vmatprep.subr.mxu0 %v68
    %1241 = vmatpush1.msra.mxu0 %v67
    %1242 = vmatprep.subr.mxu0 %v64
    %1243 = vmatpush1.msra.mxu0 %v63
    %1244 = vmatprep.subr.mxu0 %v60
    %1245 = vmatpush1.msra.mxu0 %v59
    %1246 = vmatprep.subr.mxu0 %v56
    %1247 = vmatpush1.msra.mxu0 %v55
    %1248 = vmatprep.subr.mxu0 0.0
    %1249 = vmatpush2.msra.mxu0 0.0
    %1250 = vmatprep.subr.mxu0 0.0
    %1251 = vmatpush2.msra.mxu0 0.0
    %1252 = vmatprep.subr.mxu0 0.0
    %1253 = vmatpush2.msra.mxu0 0.0
    %1254 = vmatprep.subr.mxu0 0.0
    %1255 = vmatpush2.msra.mxu0 0.0
    %1256 = vmatprep.subr.mxu0 0.0
    %1257 = vmatpush2.msra.mxu0 0.0
    %1258 = vmatprep.subr.mxu0 0.0
    %1259 = vmatpush2.msra.mxu0 0.0
    %1260 = vmatprep.subr.mxu0 0.0
    %1261 = vmatpush2.msra.mxu0 0.0
    %1262 = vmatprep.subr.mxu0 0.0
    %1263 = vmatpush2.msra.mxu0 0.0
    %1264 = vmatprep.subr.mxu0 0.0
    %1265 = vmatpush2.msra.mxu0 0.0
    %1266 = vmatprep.subr.mxu0 0.0
    %1267 = vmatpush2.msra.mxu0 0.0
    %1268 = vmatprep.subr.mxu0 0.0
    %1269 = vmatpush2.msra.mxu0 0.0
    %1270 = vmatprep.subr.mxu0 0.0
    %1271 = vmatpush2.msra.mxu0 0.0
    %1272 = vmatprep.subr.mxu0 0.0
    %1273 = vmatpush2.msra.mxu0 0.0
    %1274 = vmatprep.subr.mxu0 0.0
    %1275 = vmatpush2.msra.mxu0 0.0
    %1276 = vmatprep.subr.mxu0 0.0
    %1277 = vmatpush2.msra.mxu0 0.0
    %1278 = vmatprep.subr.mxu0 0.0
    %1279 = vmatpush2.msra.mxu0 0.0
    %1280 = vmatprep.mubr.f32.mxu0 0.0
    %1281 = vmatmul.mubr.f32.gmra.mxu0 %v1137
    %v1282 = vpop.f32.mrf.mxu0
    %v1283 = vadd.f32 0.0, %v1282
    %v1284 = vpop.f32.mrf.mxu0
    %v1285 = vadd.f32 0.0, %v1284
    %1286 = vdwg.mxu0
    %v1291 = vcombine.low %v1212, %v1214
    %v1292 = vcombine.low %v1283, %v1285
    %v1294 = vunpack.c.l.s4 1983009808
    %v1295 = vunpack.c.0.s8 %v1294
    %v1296 = vlaneseq
    %v1297 = vshrl.u32 %v1296, 7
    %v1298 = vsub.s32 %v1295, %v1297
    %v1299 = vrot.slane %v1291, %v1298
    %v1301 = vunpack.c.l.s4 1983009808
    %v1302 = vunpack.c.0.s8 %v1301
    %v1303 = vlaneseq
    %v1304 = vshrl.u32 %v1303, 7
    %v1305 = vsub.s32 %v1302, %v1304
    %v1306 = vrot.slane %v1292, %v1305
    %v1307 = vcombine.low %v1299, %v1306
    %v1309 = vadd.f32 %v1144, %v1307
    %v1310 = vxor.u32 %v1309, 2147483648
    %v1311 = vmul.f32 %v1310, 1.442695
    %v1312 = vpow.pop %v1311
    %v1313 = vadd.f32 %v1312, 1.0
    %v1314 = vrcp.pop %v1313
    %v1315 = vmul.f32 1.0, %v1314
    %v1317 = vrot.slane %v1309, 2
    %v1319 = vxor.u32 %v1317, 2147483648
    %v1320 = vmul.f32 %v1319, 1.442695
    %v1321 = vpow.pop %v1320
    %v1322 = vadd.f32 %v1321, 1.0
    %v1323 = vrcp.pop %v1322
    %v1324 = vmul.f32 1.0, %v1323
    %v1325 = vrot.slane %v1309, 4
    %v1327 = vxor.u32 %v1325, 2147483648
    %v1328 = vmul.f32 %v1327, 1.442695
    %v1329 = vpow.pop %v1328
    %v1330 = vadd.f32 %v1329, 1.0
    %v1331 = vrcp.pop %v1330
    %v1332 = vmul.f32 1.0, %v1331
    %v1333 = vrot.slane %v1309, 6
    %v1335 = vtanh.pop %v1333
    %v1336 = vmul.f32 %v1315, %v1135
    %v1337 = vmul.f32 %v1324, %v1335
    %v1338 = vadd.f32 %v1336, %v1337
    %v1339 = vtanh.pop %v1338
    %v1340 = vmul.f32 %v1332, %v1339
    %v1341 = vmul.f32 %v1340, %v322
    %v1342 = vsel %vm325, %v1341, 0.0
    %1343 = vadd.xlane.f32.xlu0 %v1342
    %v1344 = vpop.xlane.xlu0 %1343
    %v1345 = vadd.f32 %v1344, %v329
    %s1346 = scalar_lea.vmem [#allocation5], 48
    %v1347 = vld [vmem:[%s1346] sm:$0xff]
    %1348 = vmatprep.subr.mxu0 %v114
    %1349 = vmatpush1.msra.mxu0 %v113
    %1350 = vmatprep.subr.mxu0 %v110
    %1351 = vmatpush1.msra.mxu0 %v109
    %1352 = vmatprep.subr.mxu0 %v106
    %1353 = vmatpush1.msra.mxu0 %v105
    %1354 = vmatprep.subr.mxu0 %v102
    %1355 = vmatpush1.msra.mxu0 %v101
    %1356 = vmatprep.subr.mxu0 %v98
    %1357 = vmatpush1.msra.mxu0 %v97
    %1358 = vmatprep.subr.mxu0 %v94
    %1359 = vmatpush1.msra.mxu0 %v93
    %1360 = vmatprep.subr.mxu0 %v90
    %1361 = vmatpush1.msra.mxu0 %v89
    %1362 = vmatprep.subr.mxu0 %v86
    %1363 = vmatpush1.msra.mxu0 %v85
    %1364 = vmatprep.subr.mxu0 %v82
    %1365 = vmatpush1.msra.mxu0 %v81
    %1366 = vmatprep.subr.mxu0 %v78
    %1367 = vmatpush1.msra.mxu0 %v77
    %1368 = vmatprep.subr.mxu0 %v74
    %1369 = vmatpush1.msra.mxu0 %v73
    %1370 = vmatprep.subr.mxu0 %v70
    %1371 = vmatpush1.msra.mxu0 %v69
    %1372 = vmatprep.subr.mxu0 %v66
    %1373 = vmatpush1.msra.mxu0 %v65
    %1374 = vmatprep.subr.mxu0 %v62
    %1375 = vmatpush1.msra.mxu0 %v61
    %1376 = vmatprep.subr.mxu0 %v58
    %1377 = vmatpush1.msra.mxu0 %v57
    %1378 = vmatprep.subr.mxu0 %v54
    %1379 = vmatpush1.msra.mxu0 %v53
    %1380 = vmatprep.subr.mxu0 0.0
    %1381 = vmatpush2.msra.mxu0 0.0
    %1382 = vmatprep.subr.mxu0 0.0
    %1383 = vmatpush2.msra.mxu0 0.0
    %1384 = vmatprep.subr.mxu0 0.0
    %1385 = vmatpush2.msra.mxu0 0.0
    %1386 = vmatprep.subr.mxu0 0.0
    %1387 = vmatpush2.msra.mxu0 0.0
    %1388 = vmatprep.subr.mxu0 0.0
    %1389 = vmatpush2.msra.mxu0 0.0
    %1390 = vmatprep.subr.mxu0 0.0
    %1391 = vmatpush2.msra.mxu0 0.0
    %1392 = vmatprep.subr.mxu0 0.0
    %1393 = vmatpush2.msra.mxu0 0.0
    %1394 = vmatprep.subr.mxu0 0.0
    %1395 = vmatpush2.msra.mxu0 0.0
    %1396 = vmatprep.subr.mxu0 0.0
    %1397 = vmatpush2.msra.mxu0 0.0
    %1398 = vmatprep.subr.mxu0 0.0
    %1399 = vmatpush2.msra.mxu0 0.0
    %1400 = vmatprep.subr.mxu0 0.0
    %1401 = vmatpush2.msra.mxu0 0.0
    %1402 = vmatprep.subr.mxu0 0.0
    %1403 = vmatpush2.msra.mxu0 0.0
    %1404 = vmatprep.subr.mxu0 0.0
    %1405 = vmatpush2.msra.mxu0 0.0
    %1406 = vmatprep.subr.mxu0 0.0
    %1407 = vmatpush2.msra.mxu0 0.0
    %1408 = vmatprep.subr.mxu0 0.0
    %1409 = vmatpush2.msra.mxu0 0.0
    %1410 = vmatprep.subr.mxu0 0.0
    %1411 = vmatpush2.msra.mxu0 0.0
    %1412 = vmatprep.mubr.f32.mxu0 0.0
    %1413 = vmatmul.mubr.f32.gmra.mxu0 %v1340
    %v1414 = vpop.f32.mrf.mxu0
    %v1415 = vadd.f32 0.0, %v1414
    %v1416 = vpop.f32.mrf.mxu0
    %v1417 = vadd.f32 0.0, %v1416
    %1418 = vdwg.mxu0
    %1419 = vmatprep.subr.mxu0 %v116
    %1420 = vmatpush1.msra.mxu0 %v115
    %1421 = vmatprep.subr.mxu0 %v112
    %1422 = vmatpush1.msra.mxu0 %v111
    %1423 = vmatprep.subr.mxu0 %v108
    %1424 = vmatpush1.msra.mxu0 %v107
    %1425 = vmatprep.subr.mxu0 %v104
    %1426 = vmatpush1.msra.mxu0 %v103
    %1427 = vmatprep.subr.mxu0 %v100
    %1428 = vmatpush1.msra.mxu0 %v99
    %1429 = vmatprep.subr.mxu0 %v96
    %1430 = vmatpush1.msra.mxu0 %v95
    %1431 = vmatprep.subr.mxu0 %v92
    %1432 = vmatpush1.msra.mxu0 %v91
    %1433 = vmatprep.subr.mxu0 %v88
    %1434 = vmatpush1.msra.mxu0 %v87
    %1435 = vmatprep.subr.mxu0 %v84
    %1436 = vmatpush1.msra.mxu0 %v83
    %1437 = vmatprep.subr.mxu0 %v80
    %1438 = vmatpush1.msra.mxu0 %v79
    %1439 = vmatprep.subr.mxu0 %v76
    %1440 = vmatpush1.msra.mxu0 %v75
    %1441 = vmatprep.subr.mxu0 %v72
    %1442 = vmatpush1.msra.mxu0 %v71
    %1443 = vmatprep.subr.mxu0 %v68
    %1444 = vmatpush1.msra.mxu0 %v67
    %1445 = vmatprep.subr.mxu0 %v64
    %1446 = vmatpush1.msra.mxu0 %v63
    %1447 = vmatprep.subr.mxu0 %v60
    %1448 = vmatpush1.msra.mxu0 %v59
    %1449 = vmatprep.subr.mxu0 %v56
    %1450 = vmatpush1.msra.mxu0 %v55
    %1451 = vmatprep.subr.mxu0 0.0
    %1452 = vmatpush2.msra.mxu0 0.0
    %1453 = vmatprep.subr.mxu0 0.0
    %1454 = vmatpush2.msra.mxu0 0.0
    %1455 = vmatprep.subr.mxu0 0.0
    %1456 = vmatpush2.msra.mxu0 0.0
    %1457 = vmatprep.subr.mxu0 0.0
    %1458 = vmatpush2.msra.mxu0 0.0
    %1459 = vmatprep.subr.mxu0 0.0
    %1460 = vmatpush2.msra.mxu0 0.0
    %1461 = vmatprep.subr.mxu0 0.0
    %1462 = vmatpush2.msra.mxu0 0.0
    %1463 = vmatprep.subr.mxu0 0.0
    %1464 = vmatpush2.msra.mxu0 0.0
    %1465 = vmatprep.subr.mxu0 0.0
    %1466 = vmatpush2.msra.mxu0 0.0
    %1467 = vmatprep.subr.mxu0 0.0
    %1468 = vmatpush2.msra.mxu0 0.0
    %1469 = vmatprep.subr.mxu0 0.0
    %1470 = vmatpush2.msra.mxu0 0.0
    %1471 = vmatprep.subr.mxu0 0.0
    %1472 = vmatpush2.msra.mxu0 0.0
    %1473 = vmatprep.subr.mxu0 0.0
    %1474 = vmatpush2.msra.mxu0 0.0
    %1475 = vmatprep.subr.mxu0 0.0
    %1476 = vmatpush2.msra.mxu0 0.0
    %1477 = vmatprep.subr.mxu0 0.0
    %1478 = vmatpush2.msra.mxu0 0.0
    %1479 = vmatprep.subr.mxu0 0.0
    %1480 = vmatpush2.msra.mxu0 0.0
    %1481 = vmatprep.subr.mxu0 0.0
    %1482 = vmatpush2.msra.mxu0 0.0
    %1483 = vmatprep.mubr.f32.mxu0 0.0
    %1484 = vmatmul.mubr.f32.gmra.mxu0 %v1340
    %v1485 = vpop.f32.mrf.mxu0
    %v1486 = vadd.f32 0.0, %v1485
    %v1487 = vpop.f32.mrf.mxu0
    %v1488 = vadd.f32 0.0, %v1487
    %1489 = vdwg.mxu0
    %v1494 = vcombine.low %v1415, %v1417
    %v1495 = vcombine.low %v1486, %v1488
    %v1497 = vunpack.c.l.s4 1983009808
    %v1498 = vunpack.c.0.s8 %v1497
    %v1499 = vlaneseq
    %v1500 = vshrl.u32 %v1499, 7
    %v1501 = vsub.s32 %v1498, %v1500
    %v1502 = vrot.slane %v1494, %v1501
    %v1504 = vunpack.c.l.s4 1983009808
    %v1505 = vunpack.c.0.s8 %v1504
    %v1506 = vlaneseq
    %v1507 = vshrl.u32 %v1506, 7
    %v1508 = vsub.s32 %v1505, %v1507
    %v1509 = vrot.slane %v1495, %v1508
    %v1510 = vcombine.low %v1502, %v1509
    %v1512 = vadd.f32 %v1347, %v1510
    %v1513 = vxor.u32 %v1512, 2147483648
    %v1514 = vmul.f32 %v1513, 1.442695
    %v1515 = vpow.pop %v1514
    %v1516 = vadd.f32 %v1515, 1.0
    %v1517 = vrcp.pop %v1516
    %v1518 = vmul.f32 1.0, %v1517
    %v1520 = vrot.slane %v1512, 2
    %v1522 = vxor.u32 %v1520, 2147483648
    %v1523 = vmul.f32 %v1522, 1.442695
    %v1524 = vpow.pop %v1523
    %v1525 = vadd.f32 %v1524, 1.0
    %v1526 = vrcp.pop %v1525
    %v1527 = vmul.f32 1.0, %v1526
    %v1528 = vrot.slane %v1512, 4
    %v1530 = vxor.u32 %v1528, 2147483648
    %v1531 = vmul.f32 %v1530, 1.442695
    %v1532 = vpow.pop %v1531
    %v1533 = vadd.f32 %v1532, 1.0
    %v1534 = vrcp.pop %v1533
    %v1535 = vmul.f32 1.0, %v1534
    %v1536 = vrot.slane %v1512, 6
    %v1538 = vtanh.pop %v1536
    %v1539 = vmul.f32 %v1518, %v1338
    %v1540 = vmul.f32 %v1527, %v1538
    %v1541 = vadd.f32 %v1539, %v1540
    %v1542 = vtanh.pop %v1541
    %v1543 = vmul.f32 %v1535, %v1542
    %v1544 = vmul.f32 %v1543, %v322
    %v1545 = vsel %vm325, %v1544, 0.0
    %1546 = vadd.xlane.f32.xlu0 %v1545
    %v1547 = vpop.xlane.xlu0 %1546
    %v1548 = vadd.f32 %v1547, %v329
    %s1549 = scalar_lea.vmem [#allocation5], 56
    %v1550 = vld [vmem:[%s1549] sm:$0xff]
    %1551 = vmatprep.subr.mxu0 %v114
    %1552 = vmatpush1.msra.mxu0 %v113
    %1553 = vmatprep.subr.mxu0 %v110
    %1554 = vmatpush1.msra.mxu0 %v109
    %1555 = vmatprep.subr.mxu0 %v106
    %1556 = vmatpush1.msra.mxu0 %v105
    %1557 = vmatprep.subr.mxu0 %v102
    %1558 = vmatpush1.msra.mxu0 %v101
    %1559 = vmatprep.subr.mxu0 %v98
    %1560 = vmatpush1.msra.mxu0 %v97
    %1561 = vmatprep.subr.mxu0 %v94
    %1562 = vmatpush1.msra.mxu0 %v93
    %1563 = vmatprep.subr.mxu0 %v90
    %1564 = vmatpush1.msra.mxu0 %v89
    %1565 = vmatprep.subr.mxu0 %v86
    %1566 = vmatpush1.msra.mxu0 %v85
    %1567 = vmatprep.subr.mxu0 %v82
    %1568 = vmatpush1.msra.mxu0 %v81
    %1569 = vmatprep.subr.mxu0 %v78
    %1570 = vmatpush1.msra.mxu0 %v77
    %1571 = vmatprep.subr.mxu0 %v74
    %1572 = vmatpush1.msra.mxu0 %v73
    %1573 = vmatprep.subr.mxu0 %v70
    %1574 = vmatpush1.msra.mxu0 %v69
    %1575 = vmatprep.subr.mxu0 %v66
    %1576 = vmatpush1.msra.mxu0 %v65
    %1577 = vmatprep.subr.mxu0 %v62
    %1578 = vmatpush1.msra.mxu0 %v61
    %1579 = vmatprep.subr.mxu0 %v58
    %1580 = vmatpush1.msra.mxu0 %v57
    %1581 = vmatprep.subr.mxu0 %v54
    %1582 = vmatpush1.msra.mxu0 %v53
    %1583 = vmatprep.subr.mxu0 0.0
    %1584 = vmatpush2.msra.mxu0 0.0
    %1585 = vmatprep.subr.mxu0 0.0
    %1586 = vmatpush2.msra.mxu0 0.0
    %1587 = vmatprep.subr.mxu0 0.0
    %1588 = vmatpush2.msra.mxu0 0.0
    %1589 = vmatprep.subr.mxu0 0.0
    %1590 = vmatpush2.msra.mxu0 0.0
    %1591 = vmatprep.subr.mxu0 0.0
    %1592 = vmatpush2.msra.mxu0 0.0
    %1593 = vmatprep.subr.mxu0 0.0
    %1594 = vmatpush2.msra.mxu0 0.0
    %1595 = vmatprep.subr.mxu0 0.0
    %1596 = vmatpush2.msra.mxu0 0.0
    %1597 = vmatprep.subr.mxu0 0.0
    %1598 = vmatpush2.msra.mxu0 0.0
    %1599 = vmatprep.subr.mxu0 0.0
    %1600 = vmatpush2.msra.mxu0 0.0
    %1601 = vmatprep.subr.mxu0 0.0
    %1602 = vmatpush2.msra.mxu0 0.0
    %1603 = vmatprep.subr.mxu0 0.0
    %1604 = vmatpush2.msra.mxu0 0.0
    %1605 = vmatprep.subr.mxu0 0.0
    %1606 = vmatpush2.msra.mxu0 0.0
    %1607 = vmatprep.subr.mxu0 0.0
    %1608 = vmatpush2.msra.mxu0 0.0
    %1609 = vmatprep.subr.mxu0 0.0
    %1610 = vmatpush2.msra.mxu0 0.0
    %1611 = vmatprep.subr.mxu0 0.0
    %1612 = vmatpush2.msra.mxu0 0.0
    %1613 = vmatprep.subr.mxu0 0.0
    %1614 = vmatpush2.msra.mxu0 0.0
    %1615 = vmatprep.mubr.f32.mxu0 0.0
    %1616 = vmatmul.mubr.f32.gmra.mxu0 %v1543
    %v1617 = vpop.f32.mrf.mxu0
    %v1618 = vadd.f32 0.0, %v1617
    %v1619 = vpop.f32.mrf.mxu0
    %v1620 = vadd.f32 0.0, %v1619
    %1621 = vdwg.mxu0
    %1622 = vmatprep.subr.mxu0 %v116
    %1623 = vmatpush1.msra.mxu0 %v115
    %1624 = vmatprep.subr.mxu0 %v112
    %1625 = vmatpush1.msra.mxu0 %v111
    %1626 = vmatprep.subr.mxu0 %v108
    %1627 = vmatpush1.msra.mxu0 %v107
    %1628 = vmatprep.subr.mxu0 %v104
    %1629 = vmatpush1.msra.mxu0 %v103
    %1630 = vmatprep.subr.mxu0 %v100
    %1631 = vmatpush1.msra.mxu0 %v99
    %1632 = vmatprep.subr.mxu0 %v96
    %1633 = vmatpush1.msra.mxu0 %v95
    %1634 = vmatprep.subr.mxu0 %v92
    %1635 = vmatpush1.msra.mxu0 %v91
    %1636 = vmatprep.subr.mxu0 %v88
    %1637 = vmatpush1.msra.mxu0 %v87
    %1638 = vmatprep.subr.mxu0 %v84
    %1639 = vmatpush1.msra.mxu0 %v83
    %1640 = vmatprep.subr.mxu0 %v80
    %1641 = vmatpush1.msra.mxu0 %v79
    %1642 = vmatprep.subr.mxu0 %v76
    %1643 = vmatpush1.msra.mxu0 %v75
    %1644 = vmatprep.subr.mxu0 %v72
    %1645 = vmatpush1.msra.mxu0 %v71
    %1646 = vmatprep.subr.mxu0 %v68
    %1647 = vmatpush1.msra.mxu0 %v67
    %1648 = vmatprep.subr.mxu0 %v64
    %1649 = vmatpush1.msra.mxu0 %v63
    %1650 = vmatprep.subr.mxu0 %v60
    %1651 = vmatpush1.msra.mxu0 %v59
    %1652 = vmatprep.subr.mxu0 %v56
    %1653 = vmatpush1.msra.mxu0 %v55
    %1654 = vmatprep.subr.mxu0 0.0
    %1655 = vmatpush2.msra.mxu0 0.0
    %1656 = vmatprep.subr.mxu0 0.0
    %1657 = vmatpush2.msra.mxu0 0.0
    %1658 = vmatprep.subr.mxu0 0.0
    %1659 = vmatpush2.msra.mxu0 0.0
    %1660 = vmatprep.subr.mxu0 0.0
    %1661 = vmatpush2.msra.mxu0 0.0
    %1662 = vmatprep.subr.mxu0 0.0
    %1663 = vmatpush2.msra.mxu0 0.0
    %1664 = vmatprep.subr.mxu0 0.0
    %1665 = vmatpush2.msra.mxu0 0.0
    %1666 = vmatprep.subr.mxu0 0.0
    %1667 = vmatpush2.msra.mxu0 0.0
    %1668 = vmatprep.subr.mxu0 0.0
    %1669 = vmatpush2.msra.mxu0 0.0
    %1670 = vmatprep.subr.mxu0 0.0
    %1671 = vmatpush2.msra.mxu0 0.0
    %1672 = vmatprep.subr.mxu0 0.0
    %1673 = vmatpush2.msra.mxu0 0.0
    %1674 = vmatprep.subr.mxu0 0.0
    %1675 = vmatpush2.msra.mxu0 0.0
    %1676 = vmatprep.subr.mxu0 0.0
    %1677 = vmatpush2.msra.mxu0 0.0
    %1678 = vmatprep.subr.mxu0 0.0
    %1679 = vmatpush2.msra.mxu0 0.0
    %1680 = vmatprep.subr.mxu0 0.0
    %1681 = vmatpush2.msra.mxu0 0.0
    %1682 = vmatprep.subr.mxu0 0.0
    %1683 = vmatpush2.msra.mxu0 0.0
    %1684 = vmatprep.subr.mxu0 0.0
    %1685 = vmatpush2.msra.mxu0 0.0
    %1686 = vmatprep.mubr.f32.mxu0 0.0
    %1687 = vmatmul.mubr.f32.gmra.mxu0 %v1543
    %v1688 = vpop.f32.mrf.mxu0
    %v1689 = vadd.f32 0.0, %v1688
    %v1690 = vpop.f32.mrf.mxu0
    %v1691 = vadd.f32 0.0, %v1690
    %1692 = vdwg.mxu0
    %v1697 = vcombine.low %v1618, %v1620
    %v1698 = vcombine.low %v1689, %v1691
    %v1700 = vunpack.c.l.s4 1983009808
    %v1701 = vunpack.c.0.s8 %v1700
    %v1702 = vlaneseq
    %v1703 = vshrl.u32 %v1702, 7
    %v1704 = vsub.s32 %v1701, %v1703
    %v1705 = vrot.slane %v1697, %v1704
    %v1707 = vunpack.c.l.s4 1983009808
    %v1708 = vunpack.c.0.s8 %v1707
    %v1709 = vlaneseq
    %v1710 = vshrl.u32 %v1709, 7
    %v1711 = vsub.s32 %v1708, %v1710
    %v1712 = vrot.slane %v1698, %v1711
    %v1713 = vcombine.low %v1705, %v1712
    %v1715 = vadd.f32 %v1550, %v1713
    %v1716 = vxor.u32 %v1715, 2147483648
    %v1717 = vmul.f32 %v1716, 1.442695
    %v1718 = vpow.pop %v1717
    %v1719 = vadd.f32 %v1718, 1.0
    %v1720 = vrcp.pop %v1719
    %v1721 = vmul.f32 1.0, %v1720
    %v1723 = vrot.slane %v1715, 2
    %v1725 = vxor.u32 %v1723, 2147483648
    %v1726 = vmul.f32 %v1725, 1.442695
    %v1727 = vpow.pop %v1726
    %v1728 = vadd.f32 %v1727, 1.0
    %v1729 = vrcp.pop %v1728
    %v1730 = vmul.f32 1.0, %v1729
    %v1731 = vrot.slane %v1715, 4
    %v1733 = vxor.u32 %v1731, 2147483648
    %v1734 = vmul.f32 %v1733, 1.442695
    %v1735 = vpow.pop %v1734
    %v1736 = vadd.f32 %v1735, 1.0
    %v1737 = vrcp.pop %v1736
    %v1738 = vmul.f32 1.0, %v1737
    %v1739 = vrot.slane %v1715, 6
    %v1741 = vtanh.pop %v1739
    %v1742 = vmul.f32 %v1721, %v1541
    %v1743 = vmul.f32 %v1730, %v1741
    %v1744 = vadd.f32 %v1742, %v1743
    %v1745 = vtanh.pop %v1744
    %v1746 = vmul.f32 %v1738, %v1745
    %v1747 = vmul.f32 %v1746, %v322
    %v1748 = vsel %vm325, %v1747, 0.0
    %1749 = vadd.xlane.f32.xlu0 %v1748
    %v1750 = vpop.xlane.xlu0 %1749
    %v1751 = vadd.f32 %v1750, %v329
    %1752 = vst [vmem:[#allocation2] sm:$0x3] %v1746
    %1753 = vst [vmem:[#allocation3] sm:$0x3] %v1744
    %vm1754 = vcmask 7168
    %v1755 = vsel %vm1754, %v330, %v533
    %vm1756 = vcmask 15360
    %v1757 = vsel %vm1756, %v1755, %v736
    %vm1758 = vcmask 23552
    %v1759 = vsel %vm1758, %v1757, %v939
    %vm1760 = vcmask 31744
    %v1761 = vsel %vm1760, %v1759, %v1142
    %vm1762 = vcmask 39936
    %v1763 = vsel %vm1762, %v1761, %v1345
    %vm1764 = vcmask 48128
    %v1765 = vsel %vm1764, %v1763, %v1548
    %vm1766 = vcmask 56320
    %v1767 = vsel %vm1766, %v1765, %v1751
    %v1768 = vxor.u32 %v1767, 2147483648
    %v1769 = vmul.f32 %v1768, 1.442695
    %v1770 = vpow.pop %v1769
    %v1771 = vadd.f32 %v1770, 1.0
    %v1772 = vrcp.pop %v1771
    %v1773 = vmul.f32 1.0, %v1772
    %vm1774 = vcmask 58368
    %1775 = vst.msk [vmem:[#allocation10] sm:$0x3] %vm1774, %v1773
    // Predicated region
    $region30: #{tpu_custom_call.1} parent=1 // pred_check
      _
    $region31: #{tpu_custom_call.1} parent=1 // pred_check_branch
      %1777 = sbr.rel (0) target = $region33
    $region32: #{tpu_custom_call.1} parent=1 // pred_region
      %s1779 = ssub.s32 32, 32
      %1780 = vsyncadd [#allocation7], %s1779
      %s1782 = sshll.u32 [#allocation10], 4
      %s1783 = int_to_ptr.vmem [resolvable:$true] %s1782
      %1785 = dma.vmem_to_hbm [thread:$0]  %s1783, 32, %s4, [#allocation7]
    $region33: #{tpu_custom_call.1} parent=1 // pred_fallthru
      _
    // Predicated region
    $region34: #{tpu_custom_call.1} parent=1 // pred_check
      _
    $region35: #{tpu_custom_call.1} parent=1 // pred_check_branch
      %1787 = sbr.rel (0) target = $region37
    $region36: #{tpu_custom_call.1} parent=1 // pred_region
      %1788 = dma.done [#allocation7], 32
    $region37: #{tpu_custom_call.1} parent=1 // pred_fallthru
      _
    %1789 = vsyncpa [#allocation6], 1
    %1790 = vsyncpa [#allocation9], 1
    %1791 = vsyncpa [#allocation7], 1

</llo_original>
